<compile_context>
chip_gen: v6e
topology: v6e:2x2x1
jax: 0.10.0
libtpu: 0.0.40
codegen_flags: <defaults>
</compile_context>

<pallas_src>
import functools
import numpy as np

import jax
import jax.numpy as jnp
from jax import lax
from jax.experimental import pallas as pl
from jax.experimental.pallas import tpu as pltpu


def _encoding_kernel(scale, n_features, vocab, n_splits, seqs_per_block,
                     idx_ref, tbl_ref, pos_ref, out_ref):
    # idx_ref : (block_rows, F)        int32  token ids (src & tgt rows folded)
    # tbl_ref : (n_splits, F*V, F*E)   bf16   block-diagonal embedding table
    # pos_ref : (T, F*E)               f32    sinusoidal positional encoding
    # out_ref : (block_rows, F*E)             lane-dense output block
    rows = idx_ref.shape[0]
    fv = tbl_ref.shape[1]
    fe = tbl_ref.shape[2]

    idx = idx_ref[...]                                          # (rows, F)
    iota_fv = lax.broadcasted_iota(jnp.int32, (rows, fv), 1)    # fused column id

    # Build the fused one-hot: row r has a 1 at column f*V + idx[r, f] for each
    # feature f.  NOTE: out-of-range / negative ids select nothing and produce
    # a zero embedding row (torch.nn.Embedding would raise instead).
    match = jnp.zeros((rows, fv), dtype=jnp.bool_)
    for f in range(n_features):
        ids = idx[:, f:f + 1]                                   # (rows, 1)
        ids = jnp.where((ids >= 0) & (ids < vocab), ids + f * vocab, -1)
        match = jnp.logical_or(match, iota_fv == ids)
    one_hot = match.astype(jnp.bfloat16)                        # 0/1 exact in bf16

    # One (or three, for the exact-f32 split) full-width MXU matmuls.  Each
    # output element has exactly one nonzero product (block-diagonal table),
    # so the gather is exact.
    acc = jnp.zeros((rows, fe), dtype=jnp.float32)
    for s in range(n_splits):
        acc = acc + jnp.dot(one_hot, tbl_ref[s],
                            preferred_element_type=jnp.float32)

    # Replicate the resident (T, F*E) positional block across the sequences in
    # this row block (block_rows is a multiple of T by construction).
    pos = jnp.tile(pos_ref[...], (seqs_per_block, 1))           # (rows, F*E)
    out_ref[...] = (acc * scale + pos).astype(out_ref.dtype)
    # TODO(synk): nn.Dropout on the src branch is identity here (eval mode);
    # stochastic training-mode dropout is not implemented.


def _pick_block_rows(total_seqs, t, max_block_rows):
    """block_rows = m*T with m | total_seqs and (m*T) % 8 == 0.

    Prefers an even number of grid steps (v7x two-TensorCore balance), then the
    largest block <= max_block_rows.  Falls back to one full-array block if T is
    not 8-aligned (block == full dims satisfies the (8,128) rule)."""
    best = None
    for m in range(1, total_seqs + 1):
        if total_seqs % m:
            continue
        br = m * t
        if br % 8 or br > max(max_block_rows, t):
            continue
        steps = total_seqs // m
        key = (steps >= 2 and steps % 2 == 0, steps >= 2, br)
        if best is None or key > best[0]:
            best = (key, br)
    if best is None:
        return total_seqs * t
    return best[1]


def multivar_input_encoding(src, tgt, table, pos_enc, *, n_features, n_embed_dims,
                            max_block_rows=1024, exact=True, out_dtype=jnp.float32):
    """src, tgt: (B, T, F) int token ids.  Returns (src_encoded, tgt_encoded): (B, T, F*E)."""
    b, t, f = src.shape
    assert f == n_features
    e = n_embed_dims
    fe, v = f * e, table.shape[0]
    fv = f * v
    scale = float(np.sqrt(fe))
    rows = 2 * b * t                      # batch + both streams folded into one M dim

    block_rows = _pick_block_rows(2 * b, t, max_block_rows)
    seqs_per_block = block_rows // t
    grid = (rows // block_rows,)          # exact division -> no host-side padding

    idx = jnp.concatenate(
        [src.reshape(b * t, f), tgt.reshape(b * t, f)], axis=0).astype(jnp.int32)
    pos = pos_enc[:t].astype(jnp.float32)                       # (T, F*E), grid-invariant

    # Block-diagonal fused table: feature f's rows [f*V,(f+1)*V) map to output
    # columns [f*E,(f+1)*E).
    fused = jnp.einsum('fg,ve->fvge', jnp.eye(f, dtype=jnp.float32),
                       table.astype(jnp.float32)).reshape(fv, fe)
    if exact:
        # hi/mid/lo bf16 split: with 0/1 selectors each matmul is exact, and the
        # f32 sum reconstructs the original f32 table rows (f32 parity).
        hi = fused.astype(jnp.bfloat16)
        r1 = fused - hi.astype(jnp.float32)
        mid = r1.astype(jnp.bfloat16)
        lo = (r1 - mid.astype(jnp.float32)).astype(jnp.bfloat16)
        tbl = jnp.stack([hi, mid, lo])                          # (3, F*V, F*E)
    else:
        tbl = fused.astype(jnp.bfloat16)[None]                  # (1, F*V, F*E)
    n_splits = tbl.shape[0]
    # TODO(synk): for production vocab sizes the one-hot matmul must be replaced
    # by a scalar-prefetch DMA row gather (table left in HBM via memory_space=pl.ANY);
    # a resident F*V x F*E block-diagonal table will not fit v7x's 64 MiB VMEM.

    out_bytes = jnp.dtype(out_dtype).itemsize
    vmem_needed = (2 * block_rows * f * 4              # idx blocks (double-buffered)
                   + 2 * block_rows * fe * out_bytes   # output blocks (double-buffered)
                   + 2 * n_splits * fv * fe * 2        # fused table (worst case 2 bufs)
                   + 2 * t * fe * 4                    # positional block
                   + block_rows * fv * 2               # one-hot intermediate
                   + block_rows * fe * 4)              # f32 accumulator
    vmem_limit = int(min(max(2 * vmem_needed + (8 << 20), 16 << 20), 56 << 20))

    kernel = functools.partial(_encoding_kernel, scale, f, v, n_splits, seqs_per_block)

    def _build(single_buffer_invariants):
        pm = dict(pipeline_mode=pl.Buffered(1)) if single_buffer_invariants else {}
        return pl.pallas_call(
            kernel,
            out_shape=jax.ShapeDtypeStruct((rows, fe), out_dtype),
            grid_spec=pltpu.PrefetchScalarGridSpec(
                num_scalar_prefetch=0,
                grid=grid,
                in_specs=[
                    pl.BlockSpec((block_rows, f), lambda i: (i, 0)),        # token ids
                    pl.BlockSpec((n_splits, fv, fe), lambda i: (0, 0, 0), **pm),  # table
                    pl.BlockSpec((t, fe), lambda i: (0, 0), **pm),          # pos block
                ],
                out_specs=pl.BlockSpec((block_rows, fe), lambda i: (i, 0)),
            ),
            compiler_params=pltpu.CompilerParams(
                dimension_semantics=("parallel",),
                vmem_limit_bytes=vmem_limit,
            ),
        )

    try:
        out = _build(True)(idx, tbl, pos)
    except Exception:
        # pl.Buffered(1) / pipeline_mode unsupported in this JAX build: identical
        # semantics with default double-buffering of the grid-invariant inputs.
        out = _build(False)(idx, tbl, pos)

    src_out = out[:b * t].reshape(b, t, fe)
    tgt_out = out[b * t:].reshape(b, t, fe)
    return src_out, tgt_out


def make_pos_encoding(seq_len, d):
    """Sinusoidal positional encoding, identical to the PyTorch __init__ code."""
    pos = np.arange(seq_len, dtype=np.float32)[:, None]
    denom = np.exp(np.arange(0, d, 2, dtype=np.float32) * (-np.log(10000.0) / d))
    pe = np.zeros((seq_len, d), dtype=np.float32)
    pe[:, 0::2] = np.sin(pos * denom)
    pe[:, 1::2] = np.cos(pos * denom)
    return jnp.asarray(pe)


if __name__ == "__main__":
    # Module hyper-parameters (small, shapes consistent with the forward pass).
    n_unique_tokens = 64
    n_embed_dims = 32
    n_features = 4
    seq_len = 8
    batch = 2

    key = jax.random.PRNGKey(0)
    k_table, k_src, k_tgt = jax.random.split(key, 3)

    # Deterministic parameter init (nn.Embedding default ~ N(0,1)).
    token_embed_table = jax.random.normal(
        k_table, (n_unique_tokens, n_embed_dims), dtype=jnp.float32)
    # NOTE: self.feature_embedding (nn.Linear) is defined in __init__ but never
    # used in forward(), so it is intentionally omitted.
    pos_encoding = make_pos_encoding(seq_len, n_embed_dims * n_features)

    src = jax.random.randint(k_src, (batch, seq_len, n_features),
                             0, n_unique_tokens, dtype=jnp.int32)
    tgt = jax.random.randint(k_tgt, (batch, seq_len, n_features),
                             0, n_unique_tokens, dtype=jnp.int32)

    pos_np = np.asarray(pos_encoding)

    def ref(idx_btf, table_f32):
        emb = np.asarray(table_f32)[np.asarray(idx_btf)]        # (B, T, F, E)
        bb, tt, ff, ee = emb.shape
        emb = emb.reshape(bb, tt, ff * ee) * np.sqrt(ff * ee)
        return emb + pos_np[None, :tt, :]

    # Exact-f32 path (default): 3-way bf16 split reconstructs the f32 table rows.
    src_out, tgt_out = multivar_input_encoding(
        src, tgt, token_embed_table, pos_encoding,
        n_features=n_features, n_embed_dims=n_embed_dims, exact=True)
    jax.block_until_ready((src_out, tgt_out))
    np.testing.assert_allclose(np.asarray(src_out), ref(src, token_embed_table),
                               rtol=1e-5, atol=1e-5)
    np.testing.assert_allclose(np.asarray(tgt_out), ref(tgt, token_embed_table),
                               rtol=1e-5, atol=1e-5)

    # Fast path: single bf16 plane (bit-exact gather of bf16-rounded weights).
    src_fast, tgt_fast = multivar_input_encoding(
        src, tgt, token_embed_table, pos_encoding,
        n_features=n_features, n_embed_dims=n_embed_dims, exact=False)
    jax.block_until_ready((src_fast, tgt_fast))
    tbl_bf16 = token_embed_table.astype(jnp.bfloat16).astype(jnp.float32)
    np.testing.assert_allclose(np.asarray(src_fast), ref(src, tbl_bf16),
                               rtol=1e-5, atol=1e-5)
    np.testing.assert_allclose(np.asarray(tgt_fast), ref(tgt, tbl_bf16),
                               rtol=1e-5, atol=1e-5)

    print("KERNEL_OK")
</pallas_src>

<mosaic_0001>
module attributes {stable_mosaic.version = 11 : i64} {
  func.func @_encoding_kernel(%arg0: i32, %arg1: memref<16x4xi32, #tpu.memory_space<vmem>>, %arg2: memref<3x256x128xbf16, #tpu.memory_space<vmem>>, %arg3: memref<8x128xf32, #tpu.memory_space<vmem>>, %arg4: memref<16x128xf32, #tpu.memory_space<vmem>>) attributes {dimension_semantics = [#tpu.dimension_semantics<parallel>], iteration_bounds = array<i64: 2>, scalar_prefetch = 0 : i64, scratch_operands = 0 : i64, tpu.core_type = #tpu.core_type<tc>, window_params = [{transform_indices = @transform_0, window_bounds = array<i64: 16, 4>}, {pipeline_mode = #tpu.pipeline_mode<synchronous>, transform_indices = @transform_1, window_bounds = array<i64: 3, 256, 128>}, {pipeline_mode = #tpu.pipeline_mode<synchronous>, transform_indices = @transform_2, window_bounds = array<i64: 8, 128>}, {transform_indices = @transform_3, window_bounds = array<i64: 16, 128>}]} {
    %c0 = arith.constant 0 : index
    %c0_0 = arith.constant 0 : index
    %0 = vector.load %arg1[%c0, %c0_0] : memref<16x4xi32, #tpu.memory_space<vmem>>, vector<16x4xi32>
    %1 = tpu.iota {dimensions = array<i32: 1>} : vector<16x256xi32>
    %false = arith.constant false
    %2 = vector.broadcast %false : i1 to vector<16x256xi1>
    %3 = vector.extract_strided_slice %0 {offsets = [0, 0], sizes = [16, 1], strides = [1, 1]} : vector<16x4xi32> to vector<16x1xi32>
    %c0_i32 = arith.constant 0 : i32
    %4 = vector.broadcast %c0_i32 : i32 to vector<16x1xi32>
    %5 = arith.cmpi sge, %3, %4 : vector<16x1xi32>
    %c64_i32 = arith.constant 64 : i32
    %6 = vector.broadcast %c64_i32 : i32 to vector<16x1xi32>
    %7 = arith.cmpi slt, %3, %6 : vector<16x1xi32>
    %8 = arith.andi %5, %7 : vector<16x1xi1>
    %c0_i32_1 = arith.constant 0 : i32
    %9 = vector.broadcast %c0_i32_1 : i32 to vector<16x1xi32>
    %10 = arith.addi %3, %9 : vector<16x1xi32>
    %c-1_i32 = arith.constant -1 : i32
    %11 = vector.broadcast %c-1_i32 : i32 to vector<16x1xi32>
    %12 = arith.select %8, %10, %11 : vector<16x1xi1>, vector<16x1xi32>
    %13 = vector.broadcast %12 : vector<16x1xi32> to vector<16x256xi32>
    %14 = arith.cmpi eq, %1, %13 : vector<16x256xi32>
    %15 = arith.ori %2, %14 : vector<16x256xi1>
    %16 = vector.extract_strided_slice %0 {offsets = [0, 1], sizes = [16, 1], strides = [1, 1]} : vector<16x4xi32> to vector<16x1xi32>
    %c0_i32_2 = arith.constant 0 : i32
    %17 = vector.broadcast %c0_i32_2 : i32 to vector<16x1xi32>
    %18 = arith.cmpi sge, %16, %17 : vector<16x1xi32>
    %c64_i32_3 = arith.constant 64 : i32
    %19 = vector.broadcast %c64_i32_3 : i32 to vector<16x1xi32>
    %20 = arith.cmpi slt, %16, %19 : vector<16x1xi32>
    %21 = arith.andi %18, %20 : vector<16x1xi1>
    %c64_i32_4 = arith.constant 64 : i32
    %22 = vector.broadcast %c64_i32_4 : i32 to vector<16x1xi32>
    %23 = arith.addi %16, %22 : vector<16x1xi32>
    %c-1_i32_5 = arith.constant -1 : i32
    %24 = vector.broadcast %c-1_i32_5 : i32 to vector<16x1xi32>
    %25 = arith.select %21, %23, %24 : vector<16x1xi1>, vector<16x1xi32>
    %26 = vector.broadcast %25 : vector<16x1xi32> to vector<16x256xi32>
    %27 = arith.cmpi eq, %1, %26 : vector<16x256xi32>
    %28 = arith.ori %15, %27 : vector<16x256xi1>
    %29 = vector.extract_strided_slice %0 {offsets = [0, 2], sizes = [16, 1], strides = [1, 1]} : vector<16x4xi32> to vector<16x1xi32>
    %c0_i32_6 = arith.constant 0 : i32
    %30 = vector.broadcast %c0_i32_6 : i32 to vector<16x1xi32>
    %31 = arith.cmpi sge, %29, %30 : vector<16x1xi32>
    %c64_i32_7 = arith.constant 64 : i32
    %32 = vector.broadcast %c64_i32_7 : i32 to vector<16x1xi32>
    %33 = arith.cmpi slt, %29, %32 : vector<16x1xi32>
    %34 = arith.andi %31, %33 : vector<16x1xi1>
    %c128_i32 = arith.constant 128 : i32
    %35 = vector.broadcast %c128_i32 : i32 to vector<16x1xi32>
    %36 = arith.addi %29, %35 : vector<16x1xi32>
    %c-1_i32_8 = arith.constant -1 : i32
    %37 = vector.broadcast %c-1_i32_8 : i32 to vector<16x1xi32>
    %38 = arith.select %34, %36, %37 : vector<16x1xi1>, vector<16x1xi32>
    %39 = vector.broadcast %38 : vector<16x1xi32> to vector<16x256xi32>
    %40 = arith.cmpi eq, %1, %39 : vector<16x256xi32>
    %41 = arith.ori %28, %40 : vector<16x256xi1>
    %42 = vector.extract_strided_slice %0 {offsets = [0, 3], sizes = [16, 1], strides = [1, 1]} : vector<16x4xi32> to vector<16x1xi32>
    %c0_i32_9 = arith.constant 0 : i32
    %43 = vector.broadcast %c0_i32_9 : i32 to vector<16x1xi32>
    %44 = arith.cmpi sge, %42, %43 : vector<16x1xi32>
    %c64_i32_10 = arith.constant 64 : i32
    %45 = vector.broadcast %c64_i32_10 : i32 to vector<16x1xi32>
    %46 = arith.cmpi slt, %42, %45 : vector<16x1xi32>
    %47 = arith.andi %44, %46 : vector<16x1xi1>
    %c192_i32 = arith.constant 192 : i32
    %48 = vector.broadcast %c192_i32 : i32 to vector<16x1xi32>
    %49 = arith.addi %42, %48 : vector<16x1xi32>
    %c-1_i32_11 = arith.constant -1 : i32
    %50 = vector.broadcast %c-1_i32_11 : i32 to vector<16x1xi32>
    %51 = arith.select %47, %49, %50 : vector<16x1xi1>, vector<16x1xi32>
    %52 = vector.broadcast %51 : vector<16x1xi32> to vector<16x256xi32>
    %53 = arith.cmpi eq, %1, %52 : vector<16x256xi32>
    %54 = arith.ori %41, %53 : vector<16x256xi1>
    %55 = arith.extui %54 : vector<16x256xi1> to vector<16x256xi32>
    %56 = arith.sitofp %55 : vector<16x256xi32> to vector<16x256xf32>
    %57 = arith.truncf %56 : vector<16x256xf32> to vector<16x256xbf16>
    %cst = arith.constant 0.000000e+00 : f32
    %58 = vector.broadcast %cst : f32 to vector<16x128xf32>
    %c0_12 = arith.constant 0 : index
    %c0_13 = arith.constant 0 : index
    %c0_14 = arith.constant 0 : index
    %59 = vector.load %arg2[%c0_12, %c0_13, %c0_14] : memref<3x256x128xbf16, #tpu.memory_space<vmem>>, vector<1x256x128xbf16>
    %60 = vector.shape_cast %59 : vector<1x256x128xbf16> to vector<256x128xbf16>
    %cst_15 = arith.constant dense<0.000000e+00> : vector<16x128xf32>
    %61 = tpu.matmul %57, %60, %cst_15 {dimension_numbers = #tpu.dot_dimension_numbers<[1], [0], [0], [1], [0, 0, 1, 1], [], []>} : vector<16x256xbf16>, vector<256x128xbf16>, vector<16x128xf32> -> vector<16x128xf32>
    %62 = arith.addf %58, %61 : vector<16x128xf32>
    %c1 = arith.constant 1 : index
    %c0_16 = arith.constant 0 : index
    %c0_17 = arith.constant 0 : index
    %63 = vector.load %arg2[%c1, %c0_16, %c0_17] : memref<3x256x128xbf16, #tpu.memory_space<vmem>>, vector<1x256x128xbf16>
    %64 = vector.shape_cast %63 : vector<1x256x128xbf16> to vector<256x128xbf16>
    %cst_18 = arith.constant dense<0.000000e+00> : vector<16x128xf32>
    %65 = tpu.matmul %57, %64, %cst_18 {dimension_numbers = #tpu.dot_dimension_numbers<[1], [0], [0], [1], [0, 0, 1, 1], [], []>} : vector<16x256xbf16>, vector<256x128xbf16>, vector<16x128xf32> -> vector<16x128xf32>
    %66 = arith.addf %62, %65 : vector<16x128xf32>
    %c2 = arith.constant 2 : index
    %c0_19 = arith.constant 0 : index
    %c0_20 = arith.constant 0 : index
    %67 = vector.load %arg2[%c2, %c0_19, %c0_20] : memref<3x256x128xbf16, #tpu.memory_space<vmem>>, vector<1x256x128xbf16>
    %68 = vector.shape_cast %67 : vector<1x256x128xbf16> to vector<256x128xbf16>
    %cst_21 = arith.constant dense<0.000000e+00> : vector<16x128xf32>
    %69 = tpu.matmul %57, %68, %cst_21 {dimension_numbers = #tpu.dot_dimension_numbers<[1], [0], [0], [1], [0, 0, 1, 1], [], []>} : vector<16x256xbf16>, vector<256x128xbf16>, vector<16x128xf32> -> vector<16x128xf32>
    %70 = arith.addf %66, %69 : vector<16x128xf32>
    %c0_22 = arith.constant 0 : index
    %c0_23 = arith.constant 0 : index
    %71 = vector.load %arg3[%c0_22, %c0_23] : memref<8x128xf32, #tpu.memory_space<vmem>>, vector<8x128xf32>
    %72 = tpu.concatenate %71, %71 in 0 : vector<8x128xf32>, vector<8x128xf32> -> vector<16x128xf32>
    %cst_24 = arith.constant 11.3137083 : f32
    %73 = vector.broadcast %cst_24 : f32 to vector<16x128xf32>
    %74 = arith.mulf %70, %73 : vector<16x128xf32>
    %75 = arith.addf %74, %72 : vector<16x128xf32>
    %c0_25 = arith.constant 0 : index
    %c0_26 = arith.constant 0 : index
    %76 = vector.load %arg4[%c0_25, %c0_26] : memref<16x128xf32, #tpu.memory_space<vmem>>, vector<16x128xf32>
    tpu.vector_store %arg4[%c0_25, %c0_26], %75 {strides = array<i32>} : memref<16x128xf32, #tpu.memory_space<vmem>>, vector<16x128xf32>,
    return
  }
  func.func @transform_0(%arg0: i32) -> (i32, i32) {
    %c0_i32 = arith.constant 0 : i32
    %c0_i32_0 = arith.constant 0 : i32
    return %arg0, %c0_i32 : i32, i32
  }
  func.func @transform_1(%arg0: i32) -> (i32, i32, i32) {
    %c0_i32 = arith.constant 0 : i32
    %c0_i32_0 = arith.constant 0 : i32
    %c0_i32_1 = arith.constant 0 : i32
    %c0_i32_2 = arith.constant 0 : i32
    return %c0_i32, %c0_i32_0, %c0_i32_1 : i32, i32, i32
  }
  func.func @transform_2(%arg0: i32) -> (i32, i32) {
    %c0_i32 = arith.constant 0 : i32
    %c0_i32_0 = arith.constant 0 : i32
    %c0_i32_1 = arith.constant 0 : i32
    return %c0_i32, %c0_i32_0 : i32, i32
  }
  func.func @transform_3(%arg0: i32) -> (i32, i32) {
    %c0_i32 = arith.constant 0 : i32
    %c0_i32_0 = arith.constant 0 : i32
    return %arg0, %c0_i32 : i32, i32
  }
}

module attributes {stable_mosaic.version = 11 : i64} {
  func.func @_encoding_kernel(%arg0: i32, %arg1: memref<16x4xi32, #tpu.memory_space<vmem>>, %arg2: memref<3x256x128xbf16, #tpu.memory_space<vmem>>, %arg3: memref<8x128xf32, #tpu.memory_space<vmem>>, %arg4: memref<16x128xf32, #tpu.memory_space<vmem>>) attributes {dimension_semantics = [#tpu.dimension_semantics<parallel>], iteration_bounds = array<i64: 2>, scalar_prefetch = 0 : i64, scratch_operands = 0 : i64, tpu.core_type = #tpu.core_type<tc>, window_params = [{transform_indices = @transform_0, window_bounds = array<i64: 16, 4>}, {pipeline_mode = #tpu.pipeline_mode<synchronous>, transform_indices = @transform_1, window_bounds = array<i64: 3, 256, 128>}, {pipeline_mode = #tpu.pipeline_mode<synchronous>, transform_indices = @transform_2, window_bounds = array<i64: 8, 128>}, {transform_indices = @transform_3, window_bounds = array<i64: 16, 128>}]} {
    %c0 = arith.constant 0 : index
    %c0_0 = arith.constant 0 : index
    %0 = vector.load %arg1[%c0, %c0_0] : memref<16x4xi32, #tpu.memory_space<vmem>>, vector<16x4xi32>
    %1 = tpu.iota {dimensions = array<i32: 1>} : vector<16x256xi32>
    %false = arith.constant false
    %2 = vector.broadcast %false : i1 to vector<16x256xi1>
    %3 = vector.extract_strided_slice %0 {offsets = [0, 0], sizes = [16, 1], strides = [1, 1]} : vector<16x4xi32> to vector<16x1xi32>
    %c0_i32 = arith.constant 0 : i32
    %4 = vector.broadcast %c0_i32 : i32 to vector<16x1xi32>
    %5 = arith.cmpi sge, %3, %4 : vector<16x1xi32>
    %c64_i32 = arith.constant 64 : i32
    %6 = vector.broadcast %c64_i32 : i32 to vector<16x1xi32>
    %7 = arith.cmpi slt, %3, %6 : vector<16x1xi32>
    %8 = arith.andi %5, %7 : vector<16x1xi1>
    %c0_i32_1 = arith.constant 0 : i32
    %9 = vector.broadcast %c0_i32_1 : i32 to vector<16x1xi32>
    %10 = arith.addi %3, %9 : vector<16x1xi32>
    %c-1_i32 = arith.constant -1 : i32
    %11 = vector.broadcast %c-1_i32 : i32 to vector<16x1xi32>
    %12 = arith.select %8, %10, %11 : vector<16x1xi1>, vector<16x1xi32>
    %13 = vector.broadcast %12 : vector<16x1xi32> to vector<16x256xi32>
    %14 = arith.cmpi eq, %1, %13 : vector<16x256xi32>
    %15 = arith.ori %2, %14 : vector<16x256xi1>
    %16 = vector.extract_strided_slice %0 {offsets = [0, 1], sizes = [16, 1], strides = [1, 1]} : vector<16x4xi32> to vector<16x1xi32>
    %c0_i32_2 = arith.constant 0 : i32
    %17 = vector.broadcast %c0_i32_2 : i32 to vector<16x1xi32>
    %18 = arith.cmpi sge, %16, %17 : vector<16x1xi32>
    %c64_i32_3 = arith.constant 64 : i32
    %19 = vector.broadcast %c64_i32_3 : i32 to vector<16x1xi32>
    %20 = arith.cmpi slt, %16, %19 : vector<16x1xi32>
    %21 = arith.andi %18, %20 : vector<16x1xi1>
    %c64_i32_4 = arith.constant 64 : i32
    %22 = vector.broadcast %c64_i32_4 : i32 to vector<16x1xi32>
    %23 = arith.addi %16, %22 : vector<16x1xi32>
    %c-1_i32_5 = arith.constant -1 : i32
    %24 = vector.broadcast %c-1_i32_5 : i32 to vector<16x1xi32>
    %25 = arith.select %21, %23, %24 : vector<16x1xi1>, vector<16x1xi32>
    %26 = vector.broadcast %25 : vector<16x1xi32> to vector<16x256xi32>
    %27 = arith.cmpi eq, %1, %26 : vector<16x256xi32>
    %28 = arith.ori %15, %27 : vector<16x256xi1>
    %29 = vector.extract_strided_slice %0 {offsets = [0, 2], sizes = [16, 1], strides = [1, 1]} : vector<16x4xi32> to vector<16x1xi32>
    %c0_i32_6 = arith.constant 0 : i32
    %30 = vector.broadcast %c0_i32_6 : i32 to vector<16x1xi32>
    %31 = arith.cmpi sge, %29, %30 : vector<16x1xi32>
    %c64_i32_7 = arith.constant 64 : i32
    %32 = vector.broadcast %c64_i32_7 : i32 to vector<16x1xi32>
    %33 = arith.cmpi slt, %29, %32 : vector<16x1xi32>
    %34 = arith.andi %31, %33 : vector<16x1xi1>
    %c128_i32 = arith.constant 128 : i32
    %35 = vector.broadcast %c128_i32 : i32 to vector<16x1xi32>
    %36 = arith.addi %29, %35 : vector<16x1xi32>
    %c-1_i32_8 = arith.constant -1 : i32
    %37 = vector.broadcast %c-1_i32_8 : i32 to vector<16x1xi32>
    %38 = arith.select %34, %36, %37 : vector<16x1xi1>, vector<16x1xi32>
    %39 = vector.broadcast %38 : vector<16x1xi32> to vector<16x256xi32>
    %40 = arith.cmpi eq, %1, %39 : vector<16x256xi32>
    %41 = arith.ori %28, %40 : vector<16x256xi1>
    %42 = vector.extract_strided_slice %0 {offsets = [0, 3], sizes = [16, 1], strides = [1, 1]} : vector<16x4xi32> to vector<16x1xi32>
    %c0_i32_9 = arith.constant 0 : i32
    %43 = vector.broadcast %c0_i32_9 : i32 to vector<16x1xi32>
    %44 = arith.cmpi sge, %42, %43 : vector<16x1xi32>
    %c64_i32_10 = arith.constant 64 : i32
    %45 = vector.broadcast %c64_i32_10 : i32 to vector<16x1xi32>
    %46 = arith.cmpi slt, %42, %45 : vector<16x1xi32>
    %47 = arith.andi %44, %46 : vector<16x1xi1>
    %c192_i32 = arith.constant 192 : i32
    %48 = vector.broadcast %c192_i32 : i32 to vector<16x1xi32>
    %49 = arith.addi %42, %48 : vector<16x1xi32>
    %c-1_i32_11 = arith.constant -1 : i32
    %50 = vector.broadcast %c-1_i32_11 : i32 to vector<16x1xi32>
    %51 = arith.select %47, %49, %50 : vector<16x1xi1>, vector<16x1xi32>
    %52 = vector.broadcast %51 : vector<16x1xi32> to vector<16x256xi32>
    %53 = arith.cmpi eq, %1, %52 : vector<16x256xi32>
    %54 = arith.ori %41, %53 : vector<16x256xi1>
    %55 = arith.extui %54 : vector<16x256xi1> to vector<16x256xi32>
    %56 = arith.sitofp %55 : vector<16x256xi32> to vector<16x256xf32>
    %57 = arith.truncf %56 : vector<16x256xf32> to vector<16x256xbf16>
    %cst = arith.constant 0.000000e+00 : f32
    %58 = vector.broadcast %cst : f32 to vector<16x128xf32>
    %c0_12 = arith.constant 0 : index
    %c0_13 = arith.constant 0 : index
    %c0_14 = arith.constant 0 : index
    %59 = vector.load %arg2[%c0_12, %c0_13, %c0_14] : memref<3x256x128xbf16, #tpu.memory_space<vmem>>, vector<1x256x128xbf16>
    %60 = vector.shape_cast %59 : vector<1x256x128xbf16> to vector<256x128xbf16>
    %cst_15 = arith.constant dense<0.000000e+00> : vector<16x128xf32>
    %61 = tpu.matmul %57, %60, %cst_15 {dimension_numbers = #tpu.dot_dimension_numbers<[1], [0], [0], [1], [0, 0, 1, 1], [], []>} : vector<16x256xbf16>, vector<256x128xbf16>, vector<16x128xf32> -> vector<16x128xf32>
    %62 = arith.addf %58, %61 : vector<16x128xf32>
    %c1 = arith.constant 1 : index
    %c0_16 = arith.constant 0 : index
    %c0_17 = arith.constant 0 : index
    %63 = vector.load %arg2[%c1, %c0_16, %c0_17] : memref<3x256x128xbf16, #tpu.memory_space<vmem>>, vector<1x256x128xbf16>
    %64 = vector.shape_cast %63 : vector<1x256x128xbf16> to vector<256x128xbf16>
    %cst_18 = arith.constant dense<0.000000e+00> : vector<16x128xf32>
    %65 = tpu.matmul %57, %64, %cst_18 {dimension_numbers = #tpu.dot_dimension_numbers<[1], [0], [0], [1], [0, 0, 1, 1], [], []>} : vector<16x256xbf16>, vector<256x128xbf16>, vector<16x128xf32> -> vector<16x128xf32>
    %66 = arith.addf %62, %65 : vector<16x128xf32>
    %c2 = arith.constant 2 : index
    %c0_19 = arith.constant 0 : index
    %c0_20 = arith.constant 0 : index
    %67 = vector.load %arg2[%c2, %c0_19, %c0_20] : memref<3x256x128xbf16, #tpu.memory_space<vmem>>, vector<1x256x128xbf16>
    %68 = vector.shape_cast %67 : vector<1x256x128xbf16> to vector<256x128xbf16>
    %cst_21 = arith.constant dense<0.000000e+00> : vector<16x128xf32>
    %69 = tpu.matmul %57, %68, %cst_21 {dimension_numbers = #tpu.dot_dimension_numbers<[1], [0], [0], [1], [0, 0, 1, 1], [], []>} : vector<16x256xbf16>, vector<256x128xbf16>, vector<16x128xf32> -> vector<16x128xf32>
    %70 = arith.addf %66, %69 : vector<16x128xf32>
    %c0_22 = arith.constant 0 : index
    %c0_23 = arith.constant 0 : index
    %71 = vector.load %arg3[%c0_22, %c0_23] : memref<8x128xf32, #tpu.memory_space<vmem>>, vector<8x128xf32>
    %72 = tpu.concatenate %71, %71 in 0 : vector<8x128xf32>, vector<8x128xf32> -> vector<16x128xf32>
    %cst_24 = arith.constant 11.3137083 : f32
    %73 = vector.broadcast %cst_24 : f32 to vector<16x128xf32>
    %74 = arith.mulf %70, %73 : vector<16x128xf32>
    %75 = arith.addf %74, %72 : vector<16x128xf32>
    %c0_25 = arith.constant 0 : index
    %c0_26 = arith.constant 0 : index
    %76 = vector.load %arg4[%c0_25, %c0_26] : memref<16x128xf32, #tpu.memory_space<vmem>>, vector<16x128xf32>
    tpu.vector_store %arg4[%c0_25, %c0_26], %75 {strides = array<i32>} : memref<16x128xf32, #tpu.memory_space<vmem>>, vector<16x128xf32>,
    return
  }
  func.func @transform_0(%arg0: i32) -> (i32, i32) {
    %c0_i32 = arith.constant 0 : i32
    %c0_i32_0 = arith.constant 0 : i32
    return %arg0, %c0_i32 : i32, i32
  }
  func.func @transform_1(%arg0: i32) -> (i32, i32, i32) {
    %c0_i32 = arith.constant 0 : i32
    %c0_i32_0 = arith.constant 0 : i32
    %c0_i32_1 = arith.constant 0 : i32
    %c0_i32_2 = arith.constant 0 : i32
    return %c0_i32, %c0_i32_0, %c0_i32_1 : i32, i32, i32
  }
  func.func @transform_2(%arg0: i32) -> (i32, i32) {
    %c0_i32 = arith.constant 0 : i32
    %c0_i32_0 = arith.constant 0 : i32
    %c0_i32_1 = arith.constant 0 : i32
    return %c0_i32, %c0_i32_0 : i32, i32
  }
  func.func @transform_3(%arg0: i32) -> (i32, i32) {
    %c0_i32 = arith.constant 0 : i32
    %c0_i32_0 = arith.constant 0 : i32
    return %arg0, %c0_i32 : i32, i32
  }
}

</mosaic_0001>

<llo_original>
// kernel: tpu_custom_call.1
$region0: #{tpu_custom_call.1}
  #allocation0 [shape = 'u32[]', space=smem, size = 0x4, offset = 0x4, fixed_abs, tag = 'smem constant byte address 0x4 - core index']
  #allocation1 [shape = 'u32[144,128]{1,0:T(1,128)}', space=vmem, size = 0x12000, scoped, tag = 'internal scratch']
  %s0 = inlined_call_operand.vmem [shape: s32[32,4], index: 0, kind: input, shape index: {}]
  %s1 = inlined_call_operand.hbm [shape: bf16[3,256,128], index: 1, kind: input, shape index: {}]
  %s2 = inlined_call_operand.vmem [shape: f32[8,128], index: 2, kind: input, shape index: {}]
  %s3 = inlined_call_operand.hbm [shape: f32[32,128], index: 3, kind: output, shape index: {}]
  %s4 = sld [smem:[#allocation0]]
  $region49: #{tpu_custom_call.1} parent=0
    _
  %s6 = ssub.s32 1, %s4
  %s7 = scalar_select 0, %s6, %s4
  $region1: #{tpu_custom_call.1} parent=0
    #allocation2 [shape = 'u8[196608]{0}', space=vmem, size = 0x30000, scoped, tag = 'input window, operand 1, single buffered']
    #allocation3 [shape = 's32[2]{0}', space=sflag, size = 0x8, scoped, tag = 'scoped memory for tpu_custom_call.1']
    #allocation4 [shape = 's32[2]{0}', space=sflag, size = 0x8, scoped, tag = 'scoped memory for tpu_custom_call.1']
    #allocation5 [shape = 'u8[16384]{0}', space=vmem, size = 0x4000, scoped, tag = 'output window, operand 0']
    %8 = vsyncpa [#allocation3], 0
    %9 = vsyncpa [#allocation4], 0
    %s10 = scalar_lea.sflag [#allocation4], 1
    %11 = vsyncpa %s10, 0
    loop: start=0, step=1, limit=4
    $region2: #{tpu_custom_call.1} parent=1 // loop_pre_header
      _
    $region3: #{tpu_custom_call.1} parent=1 // loop_header
      %s13 = sphi 0, %s17
      %p14 = scmp.ge.s32.totalorder %s13, 4
      %s23 = sphi 0, %s25
      %s26 = sphi 0, %s23
      %s27 = sphi 0, %s26
      %s43 = sphi 0, %s27
      %s47 = sphi 0, %s47
      %s49 = sphi 0, %s47
      %s50 = sphi 0, %s49
      %s64 = sphi 0, %s50
      %s68 = sphi 0, %s68
      %s70 = sphi 0, %s68
      %s71 = sphi 0, %s70
      %s85 = sphi 0, %s71
      %s91 = sphi 0, %s93
      %s94 = sphi 0, %s91
      %s95 = sphi 0, %s94
      %s111 = sphi 0, %s95
    $region4: #{tpu_custom_call.1} parent=1 // loop_header_branch
      %16 = sbr.rel (%p14) target = $region8
    $region5: #{tpu_custom_call.1} parent=1 // loop_body
      %s18 = ssub.s32 %s13, 1
      %s19 = ssub.s32 %s13, 2
      %s20 = sadd.s32 %s13, 1
      %s21 = ssub.s32 %s13, %s20
      %p22 = scmp.eq.s32.totalorder %s21, 0
      %s24 = sadd.s32 %s23, 1
      %s25 = scalar_select %p22, %s23, %s24
      %p28 = pneg %p22
      %p29 = scmp.eq.s32.totalorder %s13, 1
      %p30 = por %p28, %p29
      %p31 = scmp.ne.s32.totalorder %s23, %s26
      %p32 = scmp.eq.s32.totalorder %s13, 0
      %p33 = por %p31, %p32
      %p34 = scmp.ne.s32.totalorder %s23, %s26
      %p35 = scmp.eq.s32.totalorder %s18, 1
      %p36 = por %p34, %p35
      %p37 = scmp.ne.s32.totalorder %s26, %s27
      %p38 = scmp.eq.s32.totalorder %s18, 0
      %p39 = por %p37, %p38
      %p40 = scmp.ne.s32.totalorder %s26, %s27
      %p41 = scmp.eq.s32.totalorder %s19, 1
      %p42 = por %p40, %p41
      %p44 = scmp.ne.s32.totalorder %s27, %s43
      %p45 = scmp.eq.s32.totalorder %s19, 0
      %p46 = por %p44, %p45
      %s48 = sadd.s32 %s47, 1
      %p51 = scmp.eq.s32.totalorder %s13, 1
      %p52 = scmp.ne.s32.totalorder %s47, %s49
      %p53 = scmp.eq.s32.totalorder %s13, 0
      %p54 = por %p52, %p53
      %p55 = scmp.ne.s32.totalorder %s47, %s49
      %p56 = scmp.eq.s32.totalorder %s18, 1
      %p57 = por %p55, %p56
      %p58 = scmp.ne.s32.totalorder %s49, %s50
      %p59 = scmp.eq.s32.totalorder %s18, 0
      %p60 = por %p58, %p59
      %p61 = scmp.ne.s32.totalorder %s49, %s50
      %p62 = scmp.eq.s32.totalorder %s19, 1
      %p63 = por %p61, %p62
      %p65 = scmp.ne.s32.totalorder %s50, %s64
      %p66 = scmp.eq.s32.totalorder %s19, 0
      %p67 = por %p65, %p66
      %s69 = sadd.s32 %s68, 1
      %p72 = scmp.eq.s32.totalorder %s13, 1
      %p73 = scmp.ne.s32.totalorder %s68, %s70
      %p74 = scmp.eq.s32.totalorder %s13, 0
      %p75 = por %p73, %p74
      %p76 = scmp.ne.s32.totalorder %s68, %s70
      %p77 = scmp.eq.s32.totalorder %s18, 1
      %p78 = por %p76, %p77
      %p79 = scmp.ne.s32.totalorder %s70, %s71
      %p80 = scmp.eq.s32.totalorder %s18, 0
      %p81 = por %p79, %p80
      %p82 = scmp.ne.s32.totalorder %s70, %s71
      %p83 = scmp.eq.s32.totalorder %s19, 1
      %p84 = por %p82, %p83
      %p86 = scmp.ne.s32.totalorder %s71, %s85
      %p87 = scmp.eq.s32.totalorder %s19, 0
      %p88 = por %p86, %p87
      %s89 = ssub.s32 %s13, %s20
      %p90 = scmp.eq.s32.totalorder %s89, 0
      %s92 = sadd.s32 %s91, 1
      %s93 = scalar_select %p90, %s91, %s92
      %p96 = pneg %p90
      %p97 = scmp.eq.s32.totalorder %s13, 1
      %p98 = por %p96, %p97
      %p99 = scmp.ne.s32.totalorder %s91, %s94
      %p100 = scmp.eq.s32.totalorder %s13, 0
      %p101 = por %p99, %p100
      %p102 = scmp.ne.s32.totalorder %s91, %s94
      %p103 = scmp.eq.s32.totalorder %s18, 1
      %p104 = por %p102, %p103
      %p105 = scmp.ne.s32.totalorder %s94, %s95
      %p106 = scmp.eq.s32.totalorder %s18, 0
      %p107 = por %p105, %p106
      %p108 = scmp.ne.s32.totalorder %s94, %s95
      %p109 = scmp.eq.s32.totalorder %s19, 1
      %p110 = por %p108, %p109
      %p112 = scmp.ne.s32.totalorder %s95, %s111
      %p113 = scmp.eq.s32.totalorder %s19, 0
      %p114 = por %p112, %p113
      %p115 = scmp.le.s32.totalorder 1, %s13
      %p116 = scmp.lt.s32.totalorder %s13, 3
      %p117 = pnand %p115, %p116
      %p118 = pneg %p117
      // Predicated region
      $region9: #{tpu_custom_call.1} parent=5 // pred_check
        _
      $region10: #{tpu_custom_call.1} parent=5 // pred_check_branch
        %120 = sbr.rel (%p117) target = $region12
      $region11: #{tpu_custom_call.1} parent=5 // pred_region
        %s121 = ssub.s32 %s13, 1
        // Predicated region
        $region13: #{tpu_custom_call.1} parent=11 // pred_check
          %p122 = pneg %p60
        $region14: #{tpu_custom_call.1} parent=11 // pred_check_branch
          %124 = sbr.rel (%p122) target = $region16
        $region15: #{tpu_custom_call.1} parent=11 // pred_region
          %s126 = ssub.s32 6144, 6144
          %127 = vsyncadd [#allocation3], %s126
          %s128 = sshll.u32 [#allocation2], 4
          %s129 = int_to_ptr.vmem [resolvable:$true] %s128
          %134 = dma.hbm_to_vmem [thread:$0]  %s1, 6144, %s129, [#allocation3], 64, 64, 4
        $region16: #{tpu_custom_call.1} parent=11 // pred_fallthru
          _
        // Predicated region
        $region17: #{tpu_custom_call.1} parent=11 // pred_check
          %p135 = pneg %p81
        $region18: #{tpu_custom_call.1} parent=11 // pred_check_branch
          %137 = sbr.rel (%p135) target = $region20
        $region19: #{tpu_custom_call.1} parent=11 // pred_region
          _
        $region20: #{tpu_custom_call.1} parent=11 // pred_fallthru
          _
      $region12: #{tpu_custom_call.1} parent=5 // pred_fallthru
        _
      %p138 = scmp.lt.s32.totalorder %s13, 2
      // Predicated region
      $region21: #{tpu_custom_call.1} parent=5 // pred_check
        %p139 = pneg %p138
      $region22: #{tpu_custom_call.1} parent=5 // pred_check_branch
        %141 = sbr.rel (%p139) target = $region24
      $region23: #{tpu_custom_call.1} parent=5 // pred_region
        // Predicated region
        $region25: #{tpu_custom_call.1} parent=23 // pred_check
          %p142 = pneg %p33
        $region26: #{tpu_custom_call.1} parent=23 // pred_check_branch
          %144 = sbr.rel (%p142) target = $region28
        $region27: #{tpu_custom_call.1} parent=23 // pred_region
          %s145 = smul.u32 2, %s13
          %p146 = scmp.lt.s32.totalorder %s145, 3
          %s147 = scalar_select %p146, %s145, 3
          %s148 = smul.addr %s147, 8
          %s149 = scalar_lea.vmem %s0, %s148
          %s150 = smul.u32 2, %s13
        $region28: #{tpu_custom_call.1} parent=23 // pred_fallthru
          _
      $region24: #{tpu_custom_call.1} parent=5 // pred_fallthru
        _
      %p151 = scmp.le.s32.totalorder 1, %s13
      %p152 = scmp.lt.s32.totalorder %s13, 3
      %p153 = pnand %p151, %p152
      %p154 = pneg %p153
      // Predicated region
      $region29: #{tpu_custom_call.1} parent=5 // pred_check
        _
      $region30: #{tpu_custom_call.1} parent=5 // pred_check_branch
        %156 = sbr.rel (%p153) target = $region32
      $region31: #{tpu_custom_call.1} parent=5 // pred_region
        %s157 = ssub.s32 %s13, 1
        // Predicated region
        $region33: #{tpu_custom_call.1} parent=31 // pred_check
          %p158 = pneg %p60
        $region34: #{tpu_custom_call.1} parent=31 // pred_check_branch
          %160 = sbr.rel (%p158) target = $region36
        $region35: #{tpu_custom_call.1} parent=31 // pred_region
          %161 = dma.done [#allocation3], 6144
        $region36: #{tpu_custom_call.1} parent=31 // pred_fallthru
          _
        %s162 = smul.u32 2, %s18
        %p163 = scmp.lt.s32.totalorder %s162, 3
        %s164 = scalar_select %p163, %s162, 3
        %s165 = smul.addr %s164, 8
        %s166 = scalar_lea.vmem %s0, %s165
        %p167 = pneg %p39
        %p168 = pneg %p36
        %p169 = pneg %p60
        %p170 = pneg %p57
        %p171 = pneg %p81
        %p172 = pneg %p78
        %p173 = pneg %p107
        %p174 = pneg %p104
        %s175 = sand.u32 %s94, 1
        %s176 = scalar_lea.sflag [#allocation4], %s175
        %s177 = sand.u32 %s94, 1
        %s178 = smul.addr %s177, 16
        %s179 = scalar_lea.vmem [#allocation5], %s178
        %s180 = smul.u32 2, %s18
        %p181 = scmp.lt.s32.totalorder %s180, 3
        %s182 = scalar_select %p181, %s180, 3
        %s183 = smul.addr %s182, 8
        %s184 = scalar_lea.vmem %s0, %s183
        %s185 = smul.u32 2, %s18
        %s186 = smul.u32 2, %s18
        %v188 = vld [vmem:[%s184] sm:$0xff]
        %v189 = vld [vmem:[%s184 + $0x8] sm:$0xff]
        %v190 = vlaneseq
        %v191 = vand.u32 %v190, 127
        %v192 = vadd.s32 %v191, 128
        %vm193 = vcmp.ge.s32.totalorder %v188, 0
        %vm194 = vcmp.ge.s32.totalorder %v189, 0
        %vm195 = vcmp.lt.s32.totalorder %v188, 64
        %vm196 = vcmp.lt.s32.totalorder %v189, 64
        %vm197 = vmand %vm193, %vm195
        %vm198 = vmand %vm194, %vm196
        %v199 = vsel %vm197, %v188, 4294967295
        %v200 = vsel %vm198, %v189, 4294967295
        %201 = vset.pattern.permute.xlu0 0
        %202 = vperm.xlu0 %201, %v199
        %v203 = vpop.permute.xlu0 %202
        %204 = vset.pattern.permute.xlu0 0
        %205 = vperm.xlu0 %204, %v200
        %v206 = vpop.permute.xlu0 %205
        %vm207 = vcmp.eq.s32.totalorder %v191, %v203
        %vm208 = vcmp.eq.s32.totalorder %v192, %v203
        %vm209 = vcmp.eq.s32.totalorder %v191, %v206
        %vm210 = vcmp.eq.s32.totalorder %v192, %v206
        %v211 = vadd.s32 %v188, 64
        %v212 = vadd.s32 %v189, 64
        %v213 = vsel %vm197, %v211, 4294967295
        %v214 = vsel %vm198, %v212, 4294967295
        %215 = vset.pattern.permute.xlu0 1
        %216 = vperm.xlu0 %215, %v213
        %v217 = vpop.permute.xlu0 %216
        %218 = vset.pattern.permute.xlu0 1
        %219 = vperm.xlu0 %218, %v214
        %v220 = vpop.permute.xlu0 %219
        %vm221 = vcmp.eq.s32.totalorder %v191, %v217
        %vm222 = vcmp.eq.s32.totalorder %v192, %v217
        %vm223 = vcmp.eq.s32.totalorder %v191, %v220
        %vm224 = vcmp.eq.s32.totalorder %v192, %v220
        %vm225 = vmor %vm207, %vm221
        %vm226 = vmor %vm208, %vm222
        %vm227 = vmor %vm209, %vm223
        %vm228 = vmor %vm210, %vm224
        %v229 = vadd.s32 %v188, 128
        %v230 = vadd.s32 %v189, 128
        %v231 = vsel %vm197, %v229, 4294967295
        %v232 = vsel %vm198, %v230, 4294967295
        %233 = vset.pattern.permute.xlu0 2
        %234 = vperm.xlu0 %233, %v231
        %v235 = vpop.permute.xlu0 %234
        %236 = vset.pattern.permute.xlu0 2
        %237 = vperm.xlu0 %236, %v232
        %v238 = vpop.permute.xlu0 %237
        %vm239 = vcmp.eq.s32.totalorder %v191, %v235
        %vm240 = vcmp.eq.s32.totalorder %v192, %v235
        %vm241 = vcmp.eq.s32.totalorder %v191, %v238
        %vm242 = vcmp.eq.s32.totalorder %v192, %v238
        %vm243 = vmor %vm225, %vm239
        %vm244 = vmor %vm226, %vm240
        %vm245 = vmor %vm227, %vm241
        %vm246 = vmor %vm228, %vm242
        %v247 = vadd.s32 %v188, 192
        %v248 = vadd.s32 %v189, 192
        %v249 = vsel %vm197, %v247, 4294967295
        %v250 = vsel %vm198, %v248, 4294967295
        %251 = vset.pattern.permute.xlu0 3
        %252 = vperm.xlu0 %251, %v249
        %v253 = vpop.permute.xlu0 %252
        %254 = vset.pattern.permute.xlu0 3
        %255 = vperm.xlu0 %254, %v250
        %v256 = vpop.permute.xlu0 %255
        %vm257 = vcmp.eq.s32.totalorder %v191, %v253
        %vm258 = vcmp.eq.s32.totalorder %v192, %v253
        %vm259 = vcmp.eq.s32.totalorder %v191, %v256
        %vm260 = vcmp.eq.s32.totalorder %v192, %v256
        %vm261 = vmor %vm243, %vm257
        %vm262 = vmor %vm244, %vm258
        %vm263 = vmor %vm245, %vm259
        %vm264 = vmor %vm246, %vm260
        %v265 = vsel %vm261, 1, 0
        %v266 = vsel %vm262, 1, 0
        %v267 = vsel %vm263, 1, 0
        %v268 = vsel %vm264, 1, 0
        %v269 = vcvt.s32.f32 %v265
        %v270 = vcvt.s32.f32 %v266
        %v271 = vcvt.s32.f32 %v267
        %v272 = vcvt.s32.f32 %v268
        %v273 = vpack.c.bf16 %v271, %v269
        %v274 = vpack.c.bf16 %v272, %v270
        %v275 = vld [vmem:[#allocation2] sm:$0xf]
        %v276 = vld [vmem:[#allocation2 + $0x4] sm:$0xf]
        %v277 = vld [vmem:[#allocation2 + $0x8] sm:$0xf]
        %v278 = vld [vmem:[#allocation2 + $0xc] sm:$0xf]
        %v279 = vld [vmem:[#allocation2 + $0x10] sm:$0xf]
        %v280 = vld [vmem:[#allocation2 + $0x14] sm:$0xf]
        %v281 = vld [vmem:[#allocation2 + $0x18] sm:$0xf]
        %v282 = vld [vmem:[#allocation2 + $0x1c] sm:$0xf]
        %v283 = vld [vmem:[#allocation2 + $0x20] sm:$0xf]
        %v284 = vld [vmem:[#allocation2 + $0x24] sm:$0xf]
        %v285 = vld [vmem:[#allocation2 + $0x28] sm:$0xf]
        %v286 = vld [vmem:[#allocation2 + $0x2c] sm:$0xf]
        %v287 = vld [vmem:[#allocation2 + $0x30] sm:$0xf]
        %v288 = vld [vmem:[#allocation2 + $0x34] sm:$0xf]
        %v289 = vld [vmem:[#allocation2 + $0x38] sm:$0xf]
        %v290 = vld [vmem:[#allocation2 + $0x3c] sm:$0xf]
        %v291 = vld [vmem:[#allocation2 + $0x40] sm:$0xf]
        %v292 = vld [vmem:[#allocation2 + $0x44] sm:$0xf]
        %v293 = vld [vmem:[#allocation2 + $0x48] sm:$0xf]
        %v294 = vld [vmem:[#allocation2 + $0x4c] sm:$0xf]
        %v295 = vld [vmem:[#allocation2 + $0x50] sm:$0xf]
        %v296 = vld [vmem:[#allocation2 + $0x54] sm:$0xf]
        %v297 = vld [vmem:[#allocation2 + $0x58] sm:$0xf]
        %v298 = vld [vmem:[#allocation2 + $0x5c] sm:$0xf]
        %v299 = vld [vmem:[#allocation2 + $0x60] sm:$0xf]
        %v300 = vld [vmem:[#allocation2 + $0x64] sm:$0xf]
        %v301 = vld [vmem:[#allocation2 + $0x68] sm:$0xf]
        %v302 = vld [vmem:[#allocation2 + $0x6c] sm:$0xf]
        %v303 = vld [vmem:[#allocation2 + $0x70] sm:$0xf]
        %v304 = vld [vmem:[#allocation2 + $0x74] sm:$0xf]
        %v305 = vld [vmem:[#allocation2 + $0x78] sm:$0xf]
        %v306 = vld [vmem:[#allocation2 + $0x7c] sm:$0xf]
        %s307 = scalar_lea.vmem [#allocation2], 128
        %v308 = vld [vmem:[%s307] sm:$0xf]
        %v309 = vld [vmem:[%s307 + $0x4] sm:$0xf]
        %v310 = vld [vmem:[%s307 + $0x8] sm:$0xf]
        %v311 = vld [vmem:[%s307 + $0xc] sm:$0xf]
        %v312 = vld [vmem:[%s307 + $0x10] sm:$0xf]
        %v313 = vld [vmem:[%s307 + $0x14] sm:$0xf]
        %v314 = vld [vmem:[%s307 + $0x18] sm:$0xf]
        %v315 = vld [vmem:[%s307 + $0x1c] sm:$0xf]
        %v316 = vld [vmem:[%s307 + $0x20] sm:$0xf]
        %v317 = vld [vmem:[%s307 + $0x24] sm:$0xf]
        %v318 = vld [vmem:[%s307 + $0x28] sm:$0xf]
        %v319 = vld [vmem:[%s307 + $0x2c] sm:$0xf]
        %v320 = vld [vmem:[%s307 + $0x30] sm:$0xf]
        %v321 = vld [vmem:[%s307 + $0x34] sm:$0xf]
        %v322 = vld [vmem:[%s307 + $0x38] sm:$0xf]
        %v323 = vld [vmem:[%s307 + $0x3c] sm:$0xf]
        %v324 = vld [vmem:[%s307 + $0x40] sm:$0xf]
        %v325 = vld [vmem:[%s307 + $0x44] sm:$0xf]
        %v326 = vld [vmem:[%s307 + $0x48] sm:$0xf]
        %v327 = vld [vmem:[%s307 + $0x4c] sm:$0xf]
        %v328 = vld [vmem:[%s307 + $0x50] sm:$0xf]
        %v329 = vld [vmem:[%s307 + $0x54] sm:$0xf]
        %v330 = vld [vmem:[%s307 + $0x58] sm:$0xf]
        %v331 = vld [vmem:[%s307 + $0x5c] sm:$0xf]
        %v332 = vld [vmem:[%s307 + $0x60] sm:$0xf]
        %v333 = vld [vmem:[%s307 + $0x64] sm:$0xf]
        %v334 = vld [vmem:[%s307 + $0x68] sm:$0xf]
        %v335 = vld [vmem:[%s307 + $0x6c] sm:$0xf]
        %v336 = vld [vmem:[%s307 + $0x70] sm:$0xf]
        %v337 = vld [vmem:[%s307 + $0x74] sm:$0xf]
        %v338 = vld [vmem:[%s307 + $0x78] sm:$0xf]
        %v339 = vld [vmem:[%s307 + $0x7c] sm:$0xf]
        %v372 = vunpack.c.l.b16 %v308
        %v373 = vunpack.c.l.b16 %v309
        %v374 = vunpack.c.l.b16 %v310
        %v375 = vunpack.c.l.b16 %v311
        %v376 = vunpack.c.l.b16 %v312
        %v377 = vunpack.c.l.b16 %v313
        %v378 = vunpack.c.l.b16 %v314
        %v379 = vunpack.c.l.b16 %v315
        %v380 = vunpack.c.l.b16 %v316
        %v381 = vunpack.c.l.b16 %v317
        %v382 = vunpack.c.l.b16 %v318
        %v383 = vunpack.c.l.b16 %v319
        %v384 = vunpack.c.l.b16 %v320
        %v385 = vunpack.c.l.b16 %v321
        %v386 = vunpack.c.l.b16 %v322
        %v387 = vunpack.c.l.b16 %v323
        %v388 = vunpack.c.l.b16 %v324
        %v389 = vunpack.c.l.b16 %v325
        %v390 = vunpack.c.l.b16 %v326
        %v391 = vunpack.c.l.b16 %v327
        %v392 = vunpack.c.l.b16 %v328
        %v393 = vunpack.c.l.b16 %v329
        %v394 = vunpack.c.l.b16 %v330
        %v395 = vunpack.c.l.b16 %v331
        %v396 = vunpack.c.l.b16 %v332
        %v397 = vunpack.c.l.b16 %v333
        %v398 = vunpack.c.l.b16 %v334
        %v399 = vunpack.c.l.b16 %v335
        %v400 = vunpack.c.l.b16 %v336
        %v401 = vunpack.c.l.b16 %v337
        %v402 = vunpack.c.l.b16 %v338
        %v403 = vunpack.c.l.b16 %v339
        %v404 = vpack.c.b16 %v373, %v372
        %v405 = vpack.c.b16 %v375, %v374
        %v406 = vpack.c.b16 %v377, %v376
        %v407 = vpack.c.b16 %v379, %v378
        %v408 = vpack.c.b16 %v381, %v380
        %v409 = vpack.c.b16 %v383, %v382
        %v410 = vpack.c.b16 %v385, %v384
        %v411 = vpack.c.b16 %v387, %v386
        %v412 = vpack.c.b16 %v389, %v388
        %v413 = vpack.c.b16 %v391, %v390
        %v414 = vpack.c.b16 %v393, %v392
        %v415 = vpack.c.b16 %v395, %v394
        %v416 = vpack.c.b16 %v397, %v396
        %v417 = vpack.c.b16 %v399, %v398
        %v418 = vpack.c.b16 %v401, %v400
        %v419 = vpack.c.b16 %v403, %v402
        %436 = vmatprep.subr.bf16.mxu0 0
        %437 = vmatpush1.bf16.msra.mxu0 %v411
        %438 = vmatprep.subr.bf16.mxu0 0
        %439 = vmatpush1.bf16.msra.mxu0 %v410
        %440 = vmatprep.subr.bf16.mxu0 0
        %441 = vmatpush1.bf16.msra.mxu0 %v409
        %442 = vmatprep.subr.bf16.mxu0 0
        %443 = vmatpush1.bf16.msra.mxu0 %v408
        %444 = vmatprep.subr.bf16.mxu0 0
        %445 = vmatpush1.bf16.msra.mxu0 %v407
        %446 = vmatprep.subr.bf16.mxu0 0
        %447 = vmatpush1.bf16.msra.mxu0 %v406
        %448 = vmatprep.subr.bf16.mxu0 0
        %449 = vmatpush1.bf16.msra.mxu0 %v405
        %450 = vmatprep.subr.bf16.mxu0 0
        %451 = vmatpush1.bf16.msra.mxu0 %v404
        %452 = vmatprep.subr.bf16.mxu0 0
        %453 = vmatpush2.bf16.msra.mxu0 %v419
        %454 = vmatprep.subr.bf16.mxu0 0
        %455 = vmatpush2.bf16.msra.mxu0 %v418
        %456 = vmatprep.subr.bf16.mxu0 0
        %457 = vmatpush2.bf16.msra.mxu0 %v417
        %458 = vmatprep.subr.bf16.mxu0 0
        %459 = vmatpush2.bf16.msra.mxu0 %v416
        %460 = vmatprep.subr.bf16.mxu0 0
        %461 = vmatpush2.bf16.msra.mxu0 %v415
        %462 = vmatprep.subr.bf16.mxu0 0
        %463 = vmatpush2.bf16.msra.mxu0 %v414
        %464 = vmatprep.subr.bf16.mxu0 0
        %465 = vmatpush2.bf16.msra.mxu0 %v413
        %466 = vmatprep.subr.bf16.mxu0 0
        %467 = vmatpush2.bf16.msra.mxu0 %v412
        %468 = vmatprep.mubr.bf16.mxu0 %v274
        %469 = vmatmul.mubr.bf16.gmra.mxu0 %v273
        %v470 = vpop.f32.mrf.mxu0
        %v471 = vadd.f32 0.0, %v470
        %v472 = vpop.f32.mrf.mxu0
        %v473 = vpop.f32.mrf.mxu0
        %v474 = vadd.f32 0.0, %v473
        %v475 = vpop.f32.mrf.mxu0
        %476 = vdwg.mxu0
        %v509 = vunpack.c.l.b16 %v275
        %v510 = vunpack.c.l.b16 %v276
        %v511 = vunpack.c.l.b16 %v277
        %v512 = vunpack.c.l.b16 %v278
        %v513 = vunpack.c.l.b16 %v279
        %v514 = vunpack.c.l.b16 %v280
        %v515 = vunpack.c.l.b16 %v281
        %v516 = vunpack.c.l.b16 %v282
        %v517 = vunpack.c.l.b16 %v283
        %v518 = vunpack.c.l.b16 %v284
        %v519 = vunpack.c.l.b16 %v285
        %v520 = vunpack.c.l.b16 %v286
        %v521 = vunpack.c.l.b16 %v287
        %v522 = vunpack.c.l.b16 %v288
        %v523 = vunpack.c.l.b16 %v289
        %v524 = vunpack.c.l.b16 %v290
        %v525 = vunpack.c.l.b16 %v291
        %v526 = vunpack.c.l.b16 %v292
        %v527 = vunpack.c.l.b16 %v293
        %v528 = vunpack.c.l.b16 %v294
        %v529 = vunpack.c.l.b16 %v295
        %v530 = vunpack.c.l.b16 %v296
        %v531 = vunpack.c.l.b16 %v297
        %v532 = vunpack.c.l.b16 %v298
        %v533 = vunpack.c.l.b16 %v299
        %v534 = vunpack.c.l.b16 %v300
        %v535 = vunpack.c.l.b16 %v301
        %v536 = vunpack.c.l.b16 %v302
        %v537 = vunpack.c.l.b16 %v303
        %v538 = vunpack.c.l.b16 %v304
        %v539 = vunpack.c.l.b16 %v305
        %v540 = vunpack.c.l.b16 %v306
        %v541 = vpack.c.b16 %v510, %v509
        %v542 = vpack.c.b16 %v512, %v511
        %v543 = vpack.c.b16 %v514, %v513
        %v544 = vpack.c.b16 %v516, %v515
        %v545 = vpack.c.b16 %v518, %v517
        %v546 = vpack.c.b16 %v520, %v519
        %v547 = vpack.c.b16 %v522, %v521
        %v548 = vpack.c.b16 %v524, %v523
        %v549 = vpack.c.b16 %v526, %v525
        %v550 = vpack.c.b16 %v528, %v527
        %v551 = vpack.c.b16 %v530, %v529
        %v552 = vpack.c.b16 %v532, %v531
        %v553 = vpack.c.b16 %v534, %v533
        %v554 = vpack.c.b16 %v536, %v535
        %v555 = vpack.c.b16 %v538, %v537
        %v556 = vpack.c.b16 %v540, %v539
        %573 = vmatprep.subr.bf16.mxu0 0
        %574 = vmatpush1.bf16.msra.mxu0 %v548
        %575 = vmatprep.subr.bf16.mxu0 0
        %576 = vmatpush1.bf16.msra.mxu0 %v547
        %577 = vmatprep.subr.bf16.mxu0 0
        %578 = vmatpush1.bf16.msra.mxu0 %v546
        %579 = vmatprep.subr.bf16.mxu0 0
        %580 = vmatpush1.bf16.msra.mxu0 %v545
        %581 = vmatprep.subr.bf16.mxu0 0
        %582 = vmatpush1.bf16.msra.mxu0 %v544
        %583 = vmatprep.subr.bf16.mxu0 0
        %584 = vmatpush1.bf16.msra.mxu0 %v543
        %585 = vmatprep.subr.bf16.mxu0 0
        %586 = vmatpush1.bf16.msra.mxu0 %v542
        %587 = vmatprep.subr.bf16.mxu0 0
        %588 = vmatpush1.bf16.msra.mxu0 %v541
        %589 = vmatprep.subr.bf16.mxu0 0
        %590 = vmatpush2.bf16.msra.mxu0 %v556
        %591 = vmatprep.subr.bf16.mxu0 0
        %592 = vmatpush2.bf16.msra.mxu0 %v555
        %593 = vmatprep.subr.bf16.mxu0 0
        %594 = vmatpush2.bf16.msra.mxu0 %v554
        %595 = vmatprep.subr.bf16.mxu0 0
        %596 = vmatpush2.bf16.msra.mxu0 %v553
        %597 = vmatprep.subr.bf16.mxu0 0
        %598 = vmatpush2.bf16.msra.mxu0 %v552
        %599 = vmatprep.subr.bf16.mxu0 0
        %600 = vmatpush2.bf16.msra.mxu0 %v551
        %601 = vmatprep.subr.bf16.mxu0 0
        %602 = vmatpush2.bf16.msra.mxu0 %v550
        %603 = vmatprep.subr.bf16.mxu0 0
        %604 = vmatpush2.bf16.msra.mxu0 %v549
        %605 = vmatprep.mubr.bf16.mxu0 %v274
        %606 = vmatmul.mubr.bf16.gmra.mxu0 %v273
        %v607 = vpop.f32.mrf.mxu0
        %v608 = vadd.f32 %v471, %v607
        %v609 = vpop.f32.mrf.mxu0
        %v610 = vpop.f32.mrf.mxu0
        %v611 = vadd.f32 %v474, %v610
        %v612 = vpop.f32.mrf.mxu0
        %613 = vdwg.mxu0
        %s614 = scalar_lea.vmem [#allocation2], 256
        %v615 = vld [vmem:[%s614] sm:$0xf]
        %v616 = vld [vmem:[%s614 + $0x4] sm:$0xf]
        %v617 = vld [vmem:[%s614 + $0x8] sm:$0xf]
        %v618 = vld [vmem:[%s614 + $0xc] sm:$0xf]
        %v619 = vld [vmem:[%s614 + $0x10] sm:$0xf]
        %v620 = vld [vmem:[%s614 + $0x14] sm:$0xf]
        %v621 = vld [vmem:[%s614 + $0x18] sm:$0xf]
        %v622 = vld [vmem:[%s614 + $0x1c] sm:$0xf]
        %v623 = vld [vmem:[%s614 + $0x20] sm:$0xf]
        %v624 = vld [vmem:[%s614 + $0x24] sm:$0xf]
        %v625 = vld [vmem:[%s614 + $0x28] sm:$0xf]
        %v626 = vld [vmem:[%s614 + $0x2c] sm:$0xf]
        %v627 = vld [vmem:[%s614 + $0x30] sm:$0xf]
        %v628 = vld [vmem:[%s614 + $0x34] sm:$0xf]
        %v629 = vld [vmem:[%s614 + $0x38] sm:$0xf]
        %v630 = vld [vmem:[%s614 + $0x3c] sm:$0xf]
        %v631 = vld [vmem:[%s614 + $0x40] sm:$0xf]
        %v632 = vld [vmem:[%s614 + $0x44] sm:$0xf]
        %v633 = vld [vmem:[%s614 + $0x48] sm:$0xf]
        %v634 = vld [vmem:[%s614 + $0x4c] sm:$0xf]
        %v635 = vld [vmem:[%s614 + $0x50] sm:$0xf]
        %v636 = vld [vmem:[%s614 + $0x54] sm:$0xf]
        %v637 = vld [vmem:[%s614 + $0x58] sm:$0xf]
        %v638 = vld [vmem:[%s614 + $0x5c] sm:$0xf]
        %v639 = vld [vmem:[%s614 + $0x60] sm:$0xf]
        %v640 = vld [vmem:[%s614 + $0x64] sm:$0xf]
        %v641 = vld [vmem:[%s614 + $0x68] sm:$0xf]
        %v642 = vld [vmem:[%s614 + $0x6c] sm:$0xf]
        %v643 = vld [vmem:[%s614 + $0x70] sm:$0xf]
        %v644 = vld [vmem:[%s614 + $0x74] sm:$0xf]
        %v645 = vld [vmem:[%s614 + $0x78] sm:$0xf]
        %v646 = vld [vmem:[%s614 + $0x7c] sm:$0xf]
        %v679 = vunpack.c.l.b16 %v615
        %v680 = vunpack.c.l.b16 %v616
        %v681 = vunpack.c.l.b16 %v617
        %v682 = vunpack.c.l.b16 %v618
        %v683 = vunpack.c.l.b16 %v619
        %v684 = vunpack.c.l.b16 %v620
        %v685 = vunpack.c.l.b16 %v621
        %v686 = vunpack.c.l.b16 %v622
        %v687 = vunpack.c.l.b16 %v623
        %v688 = vunpack.c.l.b16 %v624
        %v689 = vunpack.c.l.b16 %v625
        %v690 = vunpack.c.l.b16 %v626
        %v691 = vunpack.c.l.b16 %v627
        %v692 = vunpack.c.l.b16 %v628
        %v693 = vunpack.c.l.b16 %v629
        %v694 = vunpack.c.l.b16 %v630
        %v695 = vunpack.c.l.b16 %v631
        %v696 = vunpack.c.l.b16 %v632
        %v697 = vunpack.c.l.b16 %v633
        %v698 = vunpack.c.l.b16 %v634
        %v699 = vunpack.c.l.b16 %v635
        %v700 = vunpack.c.l.b16 %v636
        %v701 = vunpack.c.l.b16 %v637
        %v702 = vunpack.c.l.b16 %v638
        %v703 = vunpack.c.l.b16 %v639
        %v704 = vunpack.c.l.b16 %v640
        %v705 = vunpack.c.l.b16 %v641
        %v706 = vunpack.c.l.b16 %v642
        %v707 = vunpack.c.l.b16 %v643
        %v708 = vunpack.c.l.b16 %v644
        %v709 = vunpack.c.l.b16 %v645
        %v710 = vunpack.c.l.b16 %v646
        %v711 = vpack.c.b16 %v680, %v679
        %v712 = vpack.c.b16 %v682, %v681
        %v713 = vpack.c.b16 %v684, %v683
        %v714 = vpack.c.b16 %v686, %v685
        %v715 = vpack.c.b16 %v688, %v687
        %v716 = vpack.c.b16 %v690, %v689
        %v717 = vpack.c.b16 %v692, %v691
        %v718 = vpack.c.b16 %v694, %v693
        %v719 = vpack.c.b16 %v696, %v695
        %v720 = vpack.c.b16 %v698, %v697
        %v721 = vpack.c.b16 %v700, %v699
        %v722 = vpack.c.b16 %v702, %v701
        %v723 = vpack.c.b16 %v704, %v703
        %v724 = vpack.c.b16 %v706, %v705
        %v725 = vpack.c.b16 %v708, %v707
        %v726 = vpack.c.b16 %v710, %v709
        %743 = vmatprep.subr.bf16.mxu0 0
        %744 = vmatpush1.bf16.msra.mxu0 %v718
        %745 = vmatprep.subr.bf16.mxu0 0
        %746 = vmatpush1.bf16.msra.mxu0 %v717
        %747 = vmatprep.subr.bf16.mxu0 0
        %748 = vmatpush1.bf16.msra.mxu0 %v716
        %749 = vmatprep.subr.bf16.mxu0 0
        %750 = vmatpush1.bf16.msra.mxu0 %v715
        %751 = vmatprep.subr.bf16.mxu0 0
        %752 = vmatpush1.bf16.msra.mxu0 %v714
        %753 = vmatprep.subr.bf16.mxu0 0
        %754 = vmatpush1.bf16.msra.mxu0 %v713
        %755 = vmatprep.subr.bf16.mxu0 0
        %756 = vmatpush1.bf16.msra.mxu0 %v712
        %757 = vmatprep.subr.bf16.mxu0 0
        %758 = vmatpush1.bf16.msra.mxu0 %v711
        %759 = vmatprep.subr.bf16.mxu0 0
        %760 = vmatpush2.bf16.msra.mxu0 %v726
        %761 = vmatprep.subr.bf16.mxu0 0
        %762 = vmatpush2.bf16.msra.mxu0 %v725
        %763 = vmatprep.subr.bf16.mxu0 0
        %764 = vmatpush2.bf16.msra.mxu0 %v724
        %765 = vmatprep.subr.bf16.mxu0 0
        %766 = vmatpush2.bf16.msra.mxu0 %v723
        %767 = vmatprep.subr.bf16.mxu0 0
        %768 = vmatpush2.bf16.msra.mxu0 %v722
        %769 = vmatprep.subr.bf16.mxu0 0
        %770 = vmatpush2.bf16.msra.mxu0 %v721
        %771 = vmatprep.subr.bf16.mxu0 0
        %772 = vmatpush2.bf16.msra.mxu0 %v720
        %773 = vmatprep.subr.bf16.mxu0 0
        %774 = vmatpush2.bf16.msra.mxu0 %v719
        %775 = vmatprep.mubr.bf16.mxu0 %v274
        %776 = vmatmul.mubr.bf16.gmra.mxu0 %v273
        %v777 = vpop.f32.mrf.mxu0
        %v778 = vadd.f32 0.0, %v777
        %v779 = vpop.f32.mrf.mxu0
        %v780 = vpop.f32.mrf.mxu0
        %v781 = vadd.f32 0.0, %v780
        %v782 = vpop.f32.mrf.mxu0
        %783 = vdwg.mxu0
        %v784 = vadd.f32 %v608, %v778
        %v785 = vadd.f32 %v611, %v781
        %v786 = vld [vmem:[%s2] sm:$0xff]
        %v787 = vmul.f32 %v784, 11.313708
        %v788 = vmul.f32 %v785, 11.313708
        %v789 = vadd.f32 %v787, %v786
        %v790 = vadd.f32 %v788, %v786
        %791 = vst [vmem:[%s179] sm:$0xff] %v789
        %792 = vst [vmem:[%s179 + $0x8] sm:$0xff] %v790
        %s793 = sand.u32 %s94, 1
        %s794 = scalar_lea.sflag [#allocation4], %s793
        %s795 = sand.u32 %s94, 1
        %s796 = smul.addr %s795, 16
        %s797 = scalar_lea.vmem [#allocation5], %s796
        // Predicated region
        $region37: #{tpu_custom_call.1} parent=31 // pred_check
          %p798 = pneg %p104
        $region38: #{tpu_custom_call.1} parent=31 // pred_check_branch
          %800 = sbr.rel (%p798) target = $region40
        $region39: #{tpu_custom_call.1} parent=31 // pred_region
          %s801 = smul.u32 2, %s18
          %s803 = ssub.s32 256, 256
          %804 = vsyncadd %s794, %s803
          %s805 = smul.addr %s801, 128
          %s806 = scalar_lea.hbm %s3, %s805
          %s807 = sshll.u32 %s797, 4
          %s808 = int_to_ptr.vmem [resolvable:$true] %s807
          %813 = dma.vmem_to_hbm [thread:$0]  %s808, 256, %s806, %s794, 128, 128, 8
        $region40: #{tpu_custom_call.1} parent=31 // pred_fallthru
          _
      $region32: #{tpu_custom_call.1} parent=5 // pred_fallthru
        _
      %p814 = scmp.le.s32.totalorder 2, %s13
      // Predicated region
      $region41: #{tpu_custom_call.1} parent=5 // pred_check
        %p815 = pneg %p814
      $region42: #{tpu_custom_call.1} parent=5 // pred_check_branch
        %817 = sbr.rel (%p815) target = $region44
      $region43: #{tpu_custom_call.1} parent=5 // pred_region
        %s818 = ssub.s32 %s13, 2
        // Predicated region
        $region45: #{tpu_custom_call.1} parent=43 // pred_check
          %p819 = pneg %p110
        $region46: #{tpu_custom_call.1} parent=43 // pred_check_branch
          %821 = sbr.rel (%p819) target = $region48
        $region47: #{tpu_custom_call.1} parent=43 // pred_region
          %s822 = sand.u32 %s95, 1
          %s823 = scalar_lea.sflag [#allocation4], %s822
          %s824 = sand.u32 %s95, 1
          %s825 = smul.addr %s824, 16
          %s826 = scalar_lea.vmem [#allocation5], %s825
          %827 = dma.done %s823, 256
        $region48: #{tpu_custom_call.1} parent=43 // pred_fallthru
          _
      $region44: #{tpu_custom_call.1} parent=5 // pred_fallthru
        _
    $region6: #{tpu_custom_call.1} parent=1 // loop_footer
      %s17 = sadd.s32 1, %s13
    $region7: #{tpu_custom_call.1} parent=1 // loop_footer_branch
      %12 = sbr.rel target = $region3
    $region8: #{tpu_custom_call.1} parent=1 // loop_exit
      _
    %828 = vsyncpa [#allocation3], 1
    %s829 = scalar_lea.sflag [#allocation3], 1
    %830 = vsyncpa %s829, 1
    %831 = vsyncpa [#allocation4], 1
    %s832 = scalar_lea.sflag [#allocation4], 1
    %833 = vsyncpa %s832, 1

// kernel: tpu_custom_call.1
$region0: #{tpu_custom_call.1}
  #allocation0 [shape = 'u32[]', space=smem, size = 0x4, offset = 0x4, fixed_abs, tag = 'smem constant byte address 0x4 - core index']
  #allocation1 [shape = 'u32[144,128]{1,0:T(1,128)}', space=vmem, size = 0x12000, scoped, tag = 'internal scratch']
  %s0 = inlined_call_operand.vmem [shape: s32[32,4], index: 0, kind: input, shape index: {}]
  %s1 = inlined_call_operand.hbm [shape: bf16[3,256,128], index: 1, kind: input, shape index: {}]
  %s2 = inlined_call_operand.vmem [shape: f32[8,128], index: 2, kind: input, shape index: {}]
  %s3 = inlined_call_operand.hbm [shape: f32[32,128], index: 3, kind: output, shape index: {}]
  %s4 = sld [smem:[#allocation0]]
  $region49: #{tpu_custom_call.1} parent=0
    _
  %s6 = ssub.s32 1, %s4
  %s7 = scalar_select 0, %s6, %s4
  $region1: #{tpu_custom_call.1} parent=0
    #allocation2 [shape = 'u8[196608]{0}', space=vmem, size = 0x30000, scoped, tag = 'input window, operand 1, single buffered']
    #allocation3 [shape = 's32[2]{0}', space=sflag, size = 0x8, scoped, tag = 'scoped memory for tpu_custom_call.1']
    #allocation4 [shape = 's32[2]{0}', space=sflag, size = 0x8, scoped, tag = 'scoped memory for tpu_custom_call.1']
    #allocation5 [shape = 'u8[16384]{0}', space=vmem, size = 0x4000, scoped, tag = 'output window, operand 0']
    %8 = vsyncpa [#allocation3], 0
    %9 = vsyncpa [#allocation4], 0
    %s10 = scalar_lea.sflag [#allocation4], 1
    %11 = vsyncpa %s10, 0
    loop: start=0, step=1, limit=4
    $region2: #{tpu_custom_call.1} parent=1 // loop_pre_header
      _
    $region3: #{tpu_custom_call.1} parent=1 // loop_header
      %s13 = sphi 0, %s17
      %p14 = scmp.ge.s32.totalorder %s13, 4
      %s23 = sphi 0, %s25
      %s26 = sphi 0, %s23
      %s27 = sphi 0, %s26
      %s43 = sphi 0, %s27
      %s47 = sphi 0, %s47
      %s49 = sphi 0, %s47
      %s50 = sphi 0, %s49
      %s64 = sphi 0, %s50
      %s68 = sphi 0, %s68
      %s70 = sphi 0, %s68
      %s71 = sphi 0, %s70
      %s85 = sphi 0, %s71
      %s91 = sphi 0, %s93
      %s94 = sphi 0, %s91
      %s95 = sphi 0, %s94
      %s111 = sphi 0, %s95
    $region4: #{tpu_custom_call.1} parent=1 // loop_header_branch
      %16 = sbr.rel (%p14) target = $region8
    $region5: #{tpu_custom_call.1} parent=1 // loop_body
      %s18 = ssub.s32 %s13, 1
      %s19 = ssub.s32 %s13, 2
      %s20 = sadd.s32 %s13, 1
      %s21 = ssub.s32 %s13, %s20
      %p22 = scmp.eq.s32.totalorder %s21, 0
      %s24 = sadd.s32 %s23, 1
      %s25 = scalar_select %p22, %s23, %s24
      %p28 = pneg %p22
      %p29 = scmp.eq.s32.totalorder %s13, 1
      %p30 = por %p28, %p29
      %p31 = scmp.ne.s32.totalorder %s23, %s26
      %p32 = scmp.eq.s32.totalorder %s13, 0
      %p33 = por %p31, %p32
      %p34 = scmp.ne.s32.totalorder %s23, %s26
      %p35 = scmp.eq.s32.totalorder %s18, 1
      %p36 = por %p34, %p35
      %p37 = scmp.ne.s32.totalorder %s26, %s27
      %p38 = scmp.eq.s32.totalorder %s18, 0
      %p39 = por %p37, %p38
      %p40 = scmp.ne.s32.totalorder %s26, %s27
      %p41 = scmp.eq.s32.totalorder %s19, 1
      %p42 = por %p40, %p41
      %p44 = scmp.ne.s32.totalorder %s27, %s43
      %p45 = scmp.eq.s32.totalorder %s19, 0
      %p46 = por %p44, %p45
      %s48 = sadd.s32 %s47, 1
      %p51 = scmp.eq.s32.totalorder %s13, 1
      %p52 = scmp.ne.s32.totalorder %s47, %s49
      %p53 = scmp.eq.s32.totalorder %s13, 0
      %p54 = por %p52, %p53
      %p55 = scmp.ne.s32.totalorder %s47, %s49
      %p56 = scmp.eq.s32.totalorder %s18, 1
      %p57 = por %p55, %p56
      %p58 = scmp.ne.s32.totalorder %s49, %s50
      %p59 = scmp.eq.s32.totalorder %s18, 0
      %p60 = por %p58, %p59
      %p61 = scmp.ne.s32.totalorder %s49, %s50
      %p62 = scmp.eq.s32.totalorder %s19, 1
      %p63 = por %p61, %p62
      %p65 = scmp.ne.s32.totalorder %s50, %s64
      %p66 = scmp.eq.s32.totalorder %s19, 0
      %p67 = por %p65, %p66
      %s69 = sadd.s32 %s68, 1
      %p72 = scmp.eq.s32.totalorder %s13, 1
      %p73 = scmp.ne.s32.totalorder %s68, %s70
      %p74 = scmp.eq.s32.totalorder %s13, 0
      %p75 = por %p73, %p74
      %p76 = scmp.ne.s32.totalorder %s68, %s70
      %p77 = scmp.eq.s32.totalorder %s18, 1
      %p78 = por %p76, %p77
      %p79 = scmp.ne.s32.totalorder %s70, %s71
      %p80 = scmp.eq.s32.totalorder %s18, 0
      %p81 = por %p79, %p80
      %p82 = scmp.ne.s32.totalorder %s70, %s71
      %p83 = scmp.eq.s32.totalorder %s19, 1
      %p84 = por %p82, %p83
      %p86 = scmp.ne.s32.totalorder %s71, %s85
      %p87 = scmp.eq.s32.totalorder %s19, 0
      %p88 = por %p86, %p87
      %s89 = ssub.s32 %s13, %s20
      %p90 = scmp.eq.s32.totalorder %s89, 0
      %s92 = sadd.s32 %s91, 1
      %s93 = scalar_select %p90, %s91, %s92
      %p96 = pneg %p90
      %p97 = scmp.eq.s32.totalorder %s13, 1
      %p98 = por %p96, %p97
      %p99 = scmp.ne.s32.totalorder %s91, %s94
      %p100 = scmp.eq.s32.totalorder %s13, 0
      %p101 = por %p99, %p100
      %p102 = scmp.ne.s32.totalorder %s91, %s94
      %p103 = scmp.eq.s32.totalorder %s18, 1
      %p104 = por %p102, %p103
      %p105 = scmp.ne.s32.totalorder %s94, %s95
      %p106 = scmp.eq.s32.totalorder %s18, 0
      %p107 = por %p105, %p106
      %p108 = scmp.ne.s32.totalorder %s94, %s95
      %p109 = scmp.eq.s32.totalorder %s19, 1
      %p110 = por %p108, %p109
      %p112 = scmp.ne.s32.totalorder %s95, %s111
      %p113 = scmp.eq.s32.totalorder %s19, 0
      %p114 = por %p112, %p113
      %p115 = scmp.le.s32.totalorder 1, %s13
      %p116 = scmp.lt.s32.totalorder %s13, 3
      %p117 = pnand %p115, %p116
      %p118 = pneg %p117
      // Predicated region
      $region9: #{tpu_custom_call.1} parent=5 // pred_check
        _
      $region10: #{tpu_custom_call.1} parent=5 // pred_check_branch
        %120 = sbr.rel (%p117) target = $region12
      $region11: #{tpu_custom_call.1} parent=5 // pred_region
        %s121 = ssub.s32 %s13, 1
        // Predicated region
        $region13: #{tpu_custom_call.1} parent=11 // pred_check
          %p122 = pneg %p60
        $region14: #{tpu_custom_call.1} parent=11 // pred_check_branch
          %124 = sbr.rel (%p122) target = $region16
        $region15: #{tpu_custom_call.1} parent=11 // pred_region
          %s126 = ssub.s32 6144, 6144
          %127 = vsyncadd [#allocation3], %s126
          %s128 = sshll.u32 [#allocation2], 4
          %s129 = int_to_ptr.vmem [resolvable:$true] %s128
          %134 = dma.hbm_to_vmem [thread:$0]  %s1, 6144, %s129, [#allocation3], 64, 64, 4
        $region16: #{tpu_custom_call.1} parent=11 // pred_fallthru
          _
        // Predicated region
        $region17: #{tpu_custom_call.1} parent=11 // pred_check
          %p135 = pneg %p81
        $region18: #{tpu_custom_call.1} parent=11 // pred_check_branch
          %137 = sbr.rel (%p135) target = $region20
        $region19: #{tpu_custom_call.1} parent=11 // pred_region
          _
        $region20: #{tpu_custom_call.1} parent=11 // pred_fallthru
          _
      $region12: #{tpu_custom_call.1} parent=5 // pred_fallthru
        _
      %p138 = scmp.lt.s32.totalorder %s13, 2
      // Predicated region
      $region21: #{tpu_custom_call.1} parent=5 // pred_check
        %p139 = pneg %p138
      $region22: #{tpu_custom_call.1} parent=5 // pred_check_branch
        %141 = sbr.rel (%p139) target = $region24
      $region23: #{tpu_custom_call.1} parent=5 // pred_region
        // Predicated region
        $region25: #{tpu_custom_call.1} parent=23 // pred_check
          %p142 = pneg %p33
        $region26: #{tpu_custom_call.1} parent=23 // pred_check_branch
          %144 = sbr.rel (%p142) target = $region28
        $region27: #{tpu_custom_call.1} parent=23 // pred_region
          %s145 = smul.u32 2, %s13
          %p146 = scmp.lt.s32.totalorder %s145, 3
          %s147 = scalar_select %p146, %s145, 3
          %s148 = smul.addr %s147, 8
          %s149 = scalar_lea.vmem %s0, %s148
          %s150 = smul.u32 2, %s13
        $region28: #{tpu_custom_call.1} parent=23 // pred_fallthru
          _
      $region24: #{tpu_custom_call.1} parent=5 // pred_fallthru
        _
      %p151 = scmp.le.s32.totalorder 1, %s13
      %p152 = scmp.lt.s32.totalorder %s13, 3
      %p153 = pnand %p151, %p152
      %p154 = pneg %p153
      // Predicated region
      $region29: #{tpu_custom_call.1} parent=5 // pred_check
        _
      $region30: #{tpu_custom_call.1} parent=5 // pred_check_branch
        %156 = sbr.rel (%p153) target = $region32
      $region31: #{tpu_custom_call.1} parent=5 // pred_region
        %s157 = ssub.s32 %s13, 1
        // Predicated region
        $region33: #{tpu_custom_call.1} parent=31 // pred_check
          %p158 = pneg %p60
        $region34: #{tpu_custom_call.1} parent=31 // pred_check_branch
          %160 = sbr.rel (%p158) target = $region36
        $region35: #{tpu_custom_call.1} parent=31 // pred_region
          %161 = dma.done [#allocation3], 6144
        $region36: #{tpu_custom_call.1} parent=31 // pred_fallthru
          _
        %s162 = smul.u32 2, %s18
        %p163 = scmp.lt.s32.totalorder %s162, 3
        %s164 = scalar_select %p163, %s162, 3
        %s165 = smul.addr %s164, 8
        %s166 = scalar_lea.vmem %s0, %s165
        %p167 = pneg %p39
        %p168 = pneg %p36
        %p169 = pneg %p60
        %p170 = pneg %p57
        %p171 = pneg %p81
        %p172 = pneg %p78
        %p173 = pneg %p107
        %p174 = pneg %p104
        %s175 = sand.u32 %s94, 1
        %s176 = scalar_lea.sflag [#allocation4], %s175
        %s177 = sand.u32 %s94, 1
        %s178 = smul.addr %s177, 16
        %s179 = scalar_lea.vmem [#allocation5], %s178
        %s180 = smul.u32 2, %s18
        %p181 = scmp.lt.s32.totalorder %s180, 3
        %s182 = scalar_select %p181, %s180, 3
        %s183 = smul.addr %s182, 8
        %s184 = scalar_lea.vmem %s0, %s183
        %s185 = smul.u32 2, %s18
        %s186 = smul.u32 2, %s18
        %v188 = vld [vmem:[%s184] sm:$0xff]
        %v189 = vld [vmem:[%s184 + $0x8] sm:$0xff]
        %v190 = vlaneseq
        %v191 = vand.u32 %v190, 127
        %v192 = vadd.s32 %v191, 128
        %vm193 = vcmp.ge.s32.totalorder %v188, 0
        %vm194 = vcmp.ge.s32.totalorder %v189, 0
        %vm195 = vcmp.lt.s32.totalorder %v188, 64
        %vm196 = vcmp.lt.s32.totalorder %v189, 64
        %vm197 = vmand %vm193, %vm195
        %vm198 = vmand %vm194, %vm196
        %v199 = vsel %vm197, %v188, 4294967295
        %v200 = vsel %vm198, %v189, 4294967295
        %201 = vset.pattern.permute.xlu0 0
        %202 = vperm.xlu0 %201, %v199
        %v203 = vpop.permute.xlu0 %202
        %204 = vset.pattern.permute.xlu0 0
        %205 = vperm.xlu0 %204, %v200
        %v206 = vpop.permute.xlu0 %205
        %vm207 = vcmp.eq.s32.totalorder %v191, %v203
        %vm208 = vcmp.eq.s32.totalorder %v192, %v203
        %vm209 = vcmp.eq.s32.totalorder %v191, %v206
        %vm210 = vcmp.eq.s32.totalorder %v192, %v206
        %v211 = vadd.s32 %v188, 64
        %v212 = vadd.s32 %v189, 64
        %v213 = vsel %vm197, %v211, 4294967295
        %v214 = vsel %vm198, %v212, 4294967295
        %215 = vset.pattern.permute.xlu0 1
        %216 = vperm.xlu0 %215, %v213
        %v217 = vpop.permute.xlu0 %216
        %218 = vset.pattern.permute.xlu0 1
        %219 = vperm.xlu0 %218, %v214
        %v220 = vpop.permute.xlu0 %219
        %vm221 = vcmp.eq.s32.totalorder %v191, %v217
        %vm222 = vcmp.eq.s32.totalorder %v192, %v217
        %vm223 = vcmp.eq.s32.totalorder %v191, %v220
        %vm224 = vcmp.eq.s32.totalorder %v192, %v220
        %vm225 = vmor %vm207, %vm221
        %vm226 = vmor %vm208, %vm222
        %vm227 = vmor %vm209, %vm223
        %vm228 = vmor %vm210, %vm224
        %v229 = vadd.s32 %v188, 128
        %v230 = vadd.s32 %v189, 128
        %v231 = vsel %vm197, %v229, 4294967295
        %v232 = vsel %vm198, %v230, 4294967295
        %233 = vset.pattern.permute.xlu0 2
        %234 = vperm.xlu0 %233, %v231
        %v235 = vpop.permute.xlu0 %234
        %236 = vset.pattern.permute.xlu0 2
        %237 = vperm.xlu0 %236, %v232
        %v238 = vpop.permute.xlu0 %237
        %vm239 = vcmp.eq.s32.totalorder %v191, %v235
        %vm240 = vcmp.eq.s32.totalorder %v192, %v235
        %vm241 = vcmp.eq.s32.totalorder %v191, %v238
        %vm242 = vcmp.eq.s32.totalorder %v192, %v238
        %vm243 = vmor %vm225, %vm239
        %vm244 = vmor %vm226, %vm240
        %vm245 = vmor %vm227, %vm241
        %vm246 = vmor %vm228, %vm242
        %v247 = vadd.s32 %v188, 192
        %v248 = vadd.s32 %v189, 192
        %v249 = vsel %vm197, %v247, 4294967295
        %v250 = vsel %vm198, %v248, 4294967295
        %251 = vset.pattern.permute.xlu0 3
        %252 = vperm.xlu0 %251, %v249
        %v253 = vpop.permute.xlu0 %252
        %254 = vset.pattern.permute.xlu0 3
        %255 = vperm.xlu0 %254, %v250
        %v256 = vpop.permute.xlu0 %255
        %vm257 = vcmp.eq.s32.totalorder %v191, %v253
        %vm258 = vcmp.eq.s32.totalorder %v192, %v253
        %vm259 = vcmp.eq.s32.totalorder %v191, %v256
        %vm260 = vcmp.eq.s32.totalorder %v192, %v256
        %vm261 = vmor %vm243, %vm257
        %vm262 = vmor %vm244, %vm258
        %vm263 = vmor %vm245, %vm259
        %vm264 = vmor %vm246, %vm260
        %v265 = vsel %vm261, 1, 0
        %v266 = vsel %vm262, 1, 0
        %v267 = vsel %vm263, 1, 0
        %v268 = vsel %vm264, 1, 0
        %v269 = vcvt.s32.f32 %v265
        %v270 = vcvt.s32.f32 %v266
        %v271 = vcvt.s32.f32 %v267
        %v272 = vcvt.s32.f32 %v268
        %v273 = vpack.c.bf16 %v271, %v269
        %v274 = vpack.c.bf16 %v272, %v270
        %v275 = vld [vmem:[#allocation2] sm:$0xf]
        %v276 = vld [vmem:[#allocation2 + $0x4] sm:$0xf]
        %v277 = vld [vmem:[#allocation2 + $0x8] sm:$0xf]
        %v278 = vld [vmem:[#allocation2 + $0xc] sm:$0xf]
        %v279 = vld [vmem:[#allocation2 + $0x10] sm:$0xf]
        %v280 = vld [vmem:[#allocation2 + $0x14] sm:$0xf]
        %v281 = vld [vmem:[#allocation2 + $0x18] sm:$0xf]
        %v282 = vld [vmem:[#allocation2 + $0x1c] sm:$0xf]
        %v283 = vld [vmem:[#allocation2 + $0x20] sm:$0xf]
        %v284 = vld [vmem:[#allocation2 + $0x24] sm:$0xf]
        %v285 = vld [vmem:[#allocation2 + $0x28] sm:$0xf]
        %v286 = vld [vmem:[#allocation2 + $0x2c] sm:$0xf]
        %v287 = vld [vmem:[#allocation2 + $0x30] sm:$0xf]
        %v288 = vld [vmem:[#allocation2 + $0x34] sm:$0xf]
        %v289 = vld [vmem:[#allocation2 + $0x38] sm:$0xf]
        %v290 = vld [vmem:[#allocation2 + $0x3c] sm:$0xf]
        %v291 = vld [vmem:[#allocation2 + $0x40] sm:$0xf]
        %v292 = vld [vmem:[#allocation2 + $0x44] sm:$0xf]
        %v293 = vld [vmem:[#allocation2 + $0x48] sm:$0xf]
        %v294 = vld [vmem:[#allocation2 + $0x4c] sm:$0xf]
        %v295 = vld [vmem:[#allocation2 + $0x50] sm:$0xf]
        %v296 = vld [vmem:[#allocation2 + $0x54] sm:$0xf]
        %v297 = vld [vmem:[#allocation2 + $0x58] sm:$0xf]
        %v298 = vld [vmem:[#allocation2 + $0x5c] sm:$0xf]
        %v299 = vld [vmem:[#allocation2 + $0x60] sm:$0xf]
        %v300 = vld [vmem:[#allocation2 + $0x64] sm:$0xf]
        %v301 = vld [vmem:[#allocation2 + $0x68] sm:$0xf]
        %v302 = vld [vmem:[#allocation2 + $0x6c] sm:$0xf]
        %v303 = vld [vmem:[#allocation2 + $0x70] sm:$0xf]
        %v304 = vld [vmem:[#allocation2 + $0x74] sm:$0xf]
        %v305 = vld [vmem:[#allocation2 + $0x78] sm:$0xf]
        %v306 = vld [vmem:[#allocation2 + $0x7c] sm:$0xf]
        %s307 = scalar_lea.vmem [#allocation2], 128
        %v308 = vld [vmem:[%s307] sm:$0xf]
        %v309 = vld [vmem:[%s307 + $0x4] sm:$0xf]
        %v310 = vld [vmem:[%s307 + $0x8] sm:$0xf]
        %v311 = vld [vmem:[%s307 + $0xc] sm:$0xf]
        %v312 = vld [vmem:[%s307 + $0x10] sm:$0xf]
        %v313 = vld [vmem:[%s307 + $0x14] sm:$0xf]
        %v314 = vld [vmem:[%s307 + $0x18] sm:$0xf]
        %v315 = vld [vmem:[%s307 + $0x1c] sm:$0xf]
        %v316 = vld [vmem:[%s307 + $0x20] sm:$0xf]
        %v317 = vld [vmem:[%s307 + $0x24] sm:$0xf]
        %v318 = vld [vmem:[%s307 + $0x28] sm:$0xf]
        %v319 = vld [vmem:[%s307 + $0x2c] sm:$0xf]
        %v320 = vld [vmem:[%s307 + $0x30] sm:$0xf]
        %v321 = vld [vmem:[%s307 + $0x34] sm:$0xf]
        %v322 = vld [vmem:[%s307 + $0x38] sm:$0xf]
        %v323 = vld [vmem:[%s307 + $0x3c] sm:$0xf]
        %v324 = vld [vmem:[%s307 + $0x40] sm:$0xf]
        %v325 = vld [vmem:[%s307 + $0x44] sm:$0xf]
        %v326 = vld [vmem:[%s307 + $0x48] sm:$0xf]
        %v327 = vld [vmem:[%s307 + $0x4c] sm:$0xf]
        %v328 = vld [vmem:[%s307 + $0x50] sm:$0xf]
        %v329 = vld [vmem:[%s307 + $0x54] sm:$0xf]
        %v330 = vld [vmem:[%s307 + $0x58] sm:$0xf]
        %v331 = vld [vmem:[%s307 + $0x5c] sm:$0xf]
        %v332 = vld [vmem:[%s307 + $0x60] sm:$0xf]
        %v333 = vld [vmem:[%s307 + $0x64] sm:$0xf]
        %v334 = vld [vmem:[%s307 + $0x68] sm:$0xf]
        %v335 = vld [vmem:[%s307 + $0x6c] sm:$0xf]
        %v336 = vld [vmem:[%s307 + $0x70] sm:$0xf]
        %v337 = vld [vmem:[%s307 + $0x74] sm:$0xf]
        %v338 = vld [vmem:[%s307 + $0x78] sm:$0xf]
        %v339 = vld [vmem:[%s307 + $0x7c] sm:$0xf]
        %v372 = vunpack.c.l.b16 %v308
        %v373 = vunpack.c.l.b16 %v309
        %v374 = vunpack.c.l.b16 %v310
        %v375 = vunpack.c.l.b16 %v311
        %v376 = vunpack.c.l.b16 %v312
        %v377 = vunpack.c.l.b16 %v313
        %v378 = vunpack.c.l.b16 %v314
        %v379 = vunpack.c.l.b16 %v315
        %v380 = vunpack.c.l.b16 %v316
        %v381 = vunpack.c.l.b16 %v317
        %v382 = vunpack.c.l.b16 %v318
        %v383 = vunpack.c.l.b16 %v319
        %v384 = vunpack.c.l.b16 %v320
        %v385 = vunpack.c.l.b16 %v321
        %v386 = vunpack.c.l.b16 %v322
        %v387 = vunpack.c.l.b16 %v323
        %v388 = vunpack.c.l.b16 %v324
        %v389 = vunpack.c.l.b16 %v325
        %v390 = vunpack.c.l.b16 %v326
        %v391 = vunpack.c.l.b16 %v327
        %v392 = vunpack.c.l.b16 %v328
        %v393 = vunpack.c.l.b16 %v329
        %v394 = vunpack.c.l.b16 %v330
        %v395 = vunpack.c.l.b16 %v331
        %v396 = vunpack.c.l.b16 %v332
        %v397 = vunpack.c.l.b16 %v333
        %v398 = vunpack.c.l.b16 %v334
        %v399 = vunpack.c.l.b16 %v335
        %v400 = vunpack.c.l.b16 %v336
        %v401 = vunpack.c.l.b16 %v337
        %v402 = vunpack.c.l.b16 %v338
        %v403 = vunpack.c.l.b16 %v339
        %v404 = vpack.c.b16 %v373, %v372
        %v405 = vpack.c.b16 %v375, %v374
        %v406 = vpack.c.b16 %v377, %v376
        %v407 = vpack.c.b16 %v379, %v378
        %v408 = vpack.c.b16 %v381, %v380
        %v409 = vpack.c.b16 %v383, %v382
        %v410 = vpack.c.b16 %v385, %v384
        %v411 = vpack.c.b16 %v387, %v386
        %v412 = vpack.c.b16 %v389, %v388
        %v413 = vpack.c.b16 %v391, %v390
        %v414 = vpack.c.b16 %v393, %v392
        %v415 = vpack.c.b16 %v395, %v394
        %v416 = vpack.c.b16 %v397, %v396
        %v417 = vpack.c.b16 %v399, %v398
        %v418 = vpack.c.b16 %v401, %v400
        %v419 = vpack.c.b16 %v403, %v402
        %436 = vmatprep.subr.bf16.mxu0 0
        %437 = vmatpush1.bf16.msra.mxu0 %v411
        %438 = vmatprep.subr.bf16.mxu0 0
        %439 = vmatpush1.bf16.msra.mxu0 %v410
        %440 = vmatprep.subr.bf16.mxu0 0
        %441 = vmatpush1.bf16.msra.mxu0 %v409
        %442 = vmatprep.subr.bf16.mxu0 0
        %443 = vmatpush1.bf16.msra.mxu0 %v408
        %444 = vmatprep.subr.bf16.mxu0 0
        %445 = vmatpush1.bf16.msra.mxu0 %v407
        %446 = vmatprep.subr.bf16.mxu0 0
        %447 = vmatpush1.bf16.msra.mxu0 %v406
        %448 = vmatprep.subr.bf16.mxu0 0
        %449 = vmatpush1.bf16.msra.mxu0 %v405
        %450 = vmatprep.subr.bf16.mxu0 0
        %451 = vmatpush1.bf16.msra.mxu0 %v404
        %452 = vmatprep.subr.bf16.mxu0 0
        %453 = vmatpush2.bf16.msra.mxu0 %v419
        %454 = vmatprep.subr.bf16.mxu0 0
        %455 = vmatpush2.bf16.msra.mxu0 %v418
        %456 = vmatprep.subr.bf16.mxu0 0
        %457 = vmatpush2.bf16.msra.mxu0 %v417
        %458 = vmatprep.subr.bf16.mxu0 0
        %459 = vmatpush2.bf16.msra.mxu0 %v416
        %460 = vmatprep.subr.bf16.mxu0 0
        %461 = vmatpush2.bf16.msra.mxu0 %v415
        %462 = vmatprep.subr.bf16.mxu0 0
        %463 = vmatpush2.bf16.msra.mxu0 %v414
        %464 = vmatprep.subr.bf16.mxu0 0
        %465 = vmatpush2.bf16.msra.mxu0 %v413
        %466 = vmatprep.subr.bf16.mxu0 0
        %467 = vmatpush2.bf16.msra.mxu0 %v412
        %468 = vmatprep.mubr.bf16.mxu0 %v274
        %469 = vmatmul.mubr.bf16.gmra.mxu0 %v273
        %v470 = vpop.f32.mrf.mxu0
        %v471 = vadd.f32 0.0, %v470
        %v472 = vpop.f32.mrf.mxu0
        %v473 = vpop.f32.mrf.mxu0
        %v474 = vadd.f32 0.0, %v473
        %v475 = vpop.f32.mrf.mxu0
        %476 = vdwg.mxu0
        %v509 = vunpack.c.l.b16 %v275
        %v510 = vunpack.c.l.b16 %v276
        %v511 = vunpack.c.l.b16 %v277
        %v512 = vunpack.c.l.b16 %v278
        %v513 = vunpack.c.l.b16 %v279
        %v514 = vunpack.c.l.b16 %v280
        %v515 = vunpack.c.l.b16 %v281
        %v516 = vunpack.c.l.b16 %v282
        %v517 = vunpack.c.l.b16 %v283
        %v518 = vunpack.c.l.b16 %v284
        %v519 = vunpack.c.l.b16 %v285
        %v520 = vunpack.c.l.b16 %v286
        %v521 = vunpack.c.l.b16 %v287
        %v522 = vunpack.c.l.b16 %v288
        %v523 = vunpack.c.l.b16 %v289
        %v524 = vunpack.c.l.b16 %v290
        %v525 = vunpack.c.l.b16 %v291
        %v526 = vunpack.c.l.b16 %v292
        %v527 = vunpack.c.l.b16 %v293
        %v528 = vunpack.c.l.b16 %v294
        %v529 = vunpack.c.l.b16 %v295
        %v530 = vunpack.c.l.b16 %v296
        %v531 = vunpack.c.l.b16 %v297
        %v532 = vunpack.c.l.b16 %v298
        %v533 = vunpack.c.l.b16 %v299
        %v534 = vunpack.c.l.b16 %v300
        %v535 = vunpack.c.l.b16 %v301
        %v536 = vunpack.c.l.b16 %v302
        %v537 = vunpack.c.l.b16 %v303
        %v538 = vunpack.c.l.b16 %v304
        %v539 = vunpack.c.l.b16 %v305
        %v540 = vunpack.c.l.b16 %v306
        %v541 = vpack.c.b16 %v510, %v509
        %v542 = vpack.c.b16 %v512, %v511
        %v543 = vpack.c.b16 %v514, %v513
        %v544 = vpack.c.b16 %v516, %v515
        %v545 = vpack.c.b16 %v518, %v517
        %v546 = vpack.c.b16 %v520, %v519
        %v547 = vpack.c.b16 %v522, %v521
        %v548 = vpack.c.b16 %v524, %v523
        %v549 = vpack.c.b16 %v526, %v525
        %v550 = vpack.c.b16 %v528, %v527
        %v551 = vpack.c.b16 %v530, %v529
        %v552 = vpack.c.b16 %v532, %v531
        %v553 = vpack.c.b16 %v534, %v533
        %v554 = vpack.c.b16 %v536, %v535
        %v555 = vpack.c.b16 %v538, %v537
        %v556 = vpack.c.b16 %v540, %v539
        %573 = vmatprep.subr.bf16.mxu0 0
        %574 = vmatpush1.bf16.msra.mxu0 %v548
        %575 = vmatprep.subr.bf16.mxu0 0
        %576 = vmatpush1.bf16.msra.mxu0 %v547
        %577 = vmatprep.subr.bf16.mxu0 0
        %578 = vmatpush1.bf16.msra.mxu0 %v546
        %579 = vmatprep.subr.bf16.mxu0 0
        %580 = vmatpush1.bf16.msra.mxu0 %v545
        %581 = vmatprep.subr.bf16.mxu0 0
        %582 = vmatpush1.bf16.msra.mxu0 %v544
        %583 = vmatprep.subr.bf16.mxu0 0
        %584 = vmatpush1.bf16.msra.mxu0 %v543
        %585 = vmatprep.subr.bf16.mxu0 0
        %586 = vmatpush1.bf16.msra.mxu0 %v542
        %587 = vmatprep.subr.bf16.mxu0 0
        %588 = vmatpush1.bf16.msra.mxu0 %v541
        %589 = vmatprep.subr.bf16.mxu0 0
        %590 = vmatpush2.bf16.msra.mxu0 %v556
        %591 = vmatprep.subr.bf16.mxu0 0
        %592 = vmatpush2.bf16.msra.mxu0 %v555
        %593 = vmatprep.subr.bf16.mxu0 0
        %594 = vmatpush2.bf16.msra.mxu0 %v554
        %595 = vmatprep.subr.bf16.mxu0 0
        %596 = vmatpush2.bf16.msra.mxu0 %v553
        %597 = vmatprep.subr.bf16.mxu0 0
        %598 = vmatpush2.bf16.msra.mxu0 %v552
        %599 = vmatprep.subr.bf16.mxu0 0
        %600 = vmatpush2.bf16.msra.mxu0 %v551
        %601 = vmatprep.subr.bf16.mxu0 0
        %602 = vmatpush2.bf16.msra.mxu0 %v550
        %603 = vmatprep.subr.bf16.mxu0 0
        %604 = vmatpush2.bf16.msra.mxu0 %v549
        %605 = vmatprep.mubr.bf16.mxu0 %v274
        %606 = vmatmul.mubr.bf16.gmra.mxu0 %v273
        %v607 = vpop.f32.mrf.mxu0
        %v608 = vadd.f32 %v471, %v607
        %v609 = vpop.f32.mrf.mxu0
        %v610 = vpop.f32.mrf.mxu0
        %v611 = vadd.f32 %v474, %v610
        %v612 = vpop.f32.mrf.mxu0
        %613 = vdwg.mxu0
        %s614 = scalar_lea.vmem [#allocation2], 256
        %v615 = vld [vmem:[%s614] sm:$0xf]
        %v616 = vld [vmem:[%s614 + $0x4] sm:$0xf]
        %v617 = vld [vmem:[%s614 + $0x8] sm:$0xf]
        %v618 = vld [vmem:[%s614 + $0xc] sm:$0xf]
        %v619 = vld [vmem:[%s614 + $0x10] sm:$0xf]
        %v620 = vld [vmem:[%s614 + $0x14] sm:$0xf]
        %v621 = vld [vmem:[%s614 + $0x18] sm:$0xf]
        %v622 = vld [vmem:[%s614 + $0x1c] sm:$0xf]
        %v623 = vld [vmem:[%s614 + $0x20] sm:$0xf]
        %v624 = vld [vmem:[%s614 + $0x24] sm:$0xf]
        %v625 = vld [vmem:[%s614 + $0x28] sm:$0xf]
        %v626 = vld [vmem:[%s614 + $0x2c] sm:$0xf]
        %v627 = vld [vmem:[%s614 + $0x30] sm:$0xf]
        %v628 = vld [vmem:[%s614 + $0x34] sm:$0xf]
        %v629 = vld [vmem:[%s614 + $0x38] sm:$0xf]
        %v630 = vld [vmem:[%s614 + $0x3c] sm:$0xf]
        %v631 = vld [vmem:[%s614 + $0x40] sm:$0xf]
        %v632 = vld [vmem:[%s614 + $0x44] sm:$0xf]
        %v633 = vld [vmem:[%s614 + $0x48] sm:$0xf]
        %v634 = vld [vmem:[%s614 + $0x4c] sm:$0xf]
        %v635 = vld [vmem:[%s614 + $0x50] sm:$0xf]
        %v636 = vld [vmem:[%s614 + $0x54] sm:$0xf]
        %v637 = vld [vmem:[%s614 + $0x58] sm:$0xf]
        %v638 = vld [vmem:[%s614 + $0x5c] sm:$0xf]
        %v639 = vld [vmem:[%s614 + $0x60] sm:$0xf]
        %v640 = vld [vmem:[%s614 + $0x64] sm:$0xf]
        %v641 = vld [vmem:[%s614 + $0x68] sm:$0xf]
        %v642 = vld [vmem:[%s614 + $0x6c] sm:$0xf]
        %v643 = vld [vmem:[%s614 + $0x70] sm:$0xf]
        %v644 = vld [vmem:[%s614 + $0x74] sm:$0xf]
        %v645 = vld [vmem:[%s614 + $0x78] sm:$0xf]
        %v646 = vld [vmem:[%s614 + $0x7c] sm:$0xf]
        %v679 = vunpack.c.l.b16 %v615
        %v680 = vunpack.c.l.b16 %v616
        %v681 = vunpack.c.l.b16 %v617
        %v682 = vunpack.c.l.b16 %v618
        %v683 = vunpack.c.l.b16 %v619
        %v684 = vunpack.c.l.b16 %v620
        %v685 = vunpack.c.l.b16 %v621
        %v686 = vunpack.c.l.b16 %v622
        %v687 = vunpack.c.l.b16 %v623
        %v688 = vunpack.c.l.b16 %v624
        %v689 = vunpack.c.l.b16 %v625
        %v690 = vunpack.c.l.b16 %v626
        %v691 = vunpack.c.l.b16 %v627
        %v692 = vunpack.c.l.b16 %v628
        %v693 = vunpack.c.l.b16 %v629
        %v694 = vunpack.c.l.b16 %v630
        %v695 = vunpack.c.l.b16 %v631
        %v696 = vunpack.c.l.b16 %v632
        %v697 = vunpack.c.l.b16 %v633
        %v698 = vunpack.c.l.b16 %v634
        %v699 = vunpack.c.l.b16 %v635
        %v700 = vunpack.c.l.b16 %v636
        %v701 = vunpack.c.l.b16 %v637
        %v702 = vunpack.c.l.b16 %v638
        %v703 = vunpack.c.l.b16 %v639
        %v704 = vunpack.c.l.b16 %v640
        %v705 = vunpack.c.l.b16 %v641
        %v706 = vunpack.c.l.b16 %v642
        %v707 = vunpack.c.l.b16 %v643
        %v708 = vunpack.c.l.b16 %v644
        %v709 = vunpack.c.l.b16 %v645
        %v710 = vunpack.c.l.b16 %v646
        %v711 = vpack.c.b16 %v680, %v679
        %v712 = vpack.c.b16 %v682, %v681
        %v713 = vpack.c.b16 %v684, %v683
        %v714 = vpack.c.b16 %v686, %v685
        %v715 = vpack.c.b16 %v688, %v687
        %v716 = vpack.c.b16 %v690, %v689
        %v717 = vpack.c.b16 %v692, %v691
        %v718 = vpack.c.b16 %v694, %v693
        %v719 = vpack.c.b16 %v696, %v695
        %v720 = vpack.c.b16 %v698, %v697
        %v721 = vpack.c.b16 %v700, %v699
        %v722 = vpack.c.b16 %v702, %v701
        %v723 = vpack.c.b16 %v704, %v703
        %v724 = vpack.c.b16 %v706, %v705
        %v725 = vpack.c.b16 %v708, %v707
        %v726 = vpack.c.b16 %v710, %v709
        %743 = vmatprep.subr.bf16.mxu0 0
        %744 = vmatpush1.bf16.msra.mxu0 %v718
        %745 = vmatprep.subr.bf16.mxu0 0
        %746 = vmatpush1.bf16.msra.mxu0 %v717
        %747 = vmatprep.subr.bf16.mxu0 0
        %748 = vmatpush1.bf16.msra.mxu0 %v716
        %749 = vmatprep.subr.bf16.mxu0 0
        %750 = vmatpush1.bf16.msra.mxu0 %v715
        %751 = vmatprep.subr.bf16.mxu0 0
        %752 = vmatpush1.bf16.msra.mxu0 %v714
        %753 = vmatprep.subr.bf16.mxu0 0
        %754 = vmatpush1.bf16.msra.mxu0 %v713
        %755 = vmatprep.subr.bf16.mxu0 0
        %756 = vmatpush1.bf16.msra.mxu0 %v712
        %757 = vmatprep.subr.bf16.mxu0 0
        %758 = vmatpush1.bf16.msra.mxu0 %v711
        %759 = vmatprep.subr.bf16.mxu0 0
        %760 = vmatpush2.bf16.msra.mxu0 %v726
        %761 = vmatprep.subr.bf16.mxu0 0
        %762 = vmatpush2.bf16.msra.mxu0 %v725
        %763 = vmatprep.subr.bf16.mxu0 0
        %764 = vmatpush2.bf16.msra.mxu0 %v724
        %765 = vmatprep.subr.bf16.mxu0 0
        %766 = vmatpush2.bf16.msra.mxu0 %v723
        %767 = vmatprep.subr.bf16.mxu0 0
        %768 = vmatpush2.bf16.msra.mxu0 %v722
        %769 = vmatprep.subr.bf16.mxu0 0
        %770 = vmatpush2.bf16.msra.mxu0 %v721
        %771 = vmatprep.subr.bf16.mxu0 0
        %772 = vmatpush2.bf16.msra.mxu0 %v720
        %773 = vmatprep.subr.bf16.mxu0 0
        %774 = vmatpush2.bf16.msra.mxu0 %v719
        %775 = vmatprep.mubr.bf16.mxu0 %v274
        %776 = vmatmul.mubr.bf16.gmra.mxu0 %v273
        %v777 = vpop.f32.mrf.mxu0
        %v778 = vadd.f32 0.0, %v777
        %v779 = vpop.f32.mrf.mxu0
        %v780 = vpop.f32.mrf.mxu0
        %v781 = vadd.f32 0.0, %v780
        %v782 = vpop.f32.mrf.mxu0
        %783 = vdwg.mxu0
        %v784 = vadd.f32 %v608, %v778
        %v785 = vadd.f32 %v611, %v781
        %v786 = vld [vmem:[%s2] sm:$0xff]
        %v787 = vmul.f32 %v784, 11.313708
        %v788 = vmul.f32 %v785, 11.313708
        %v789 = vadd.f32 %v787, %v786
        %v790 = vadd.f32 %v788, %v786
        %791 = vst [vmem:[%s179] sm:$0xff] %v789
        %792 = vst [vmem:[%s179 + $0x8] sm:$0xff] %v790
        %s793 = sand.u32 %s94, 1
        %s794 = scalar_lea.sflag [#allocation4], %s793
        %s795 = sand.u32 %s94, 1
        %s796 = smul.addr %s795, 16
        %s797 = scalar_lea.vmem [#allocation5], %s796
        // Predicated region
        $region37: #{tpu_custom_call.1} parent=31 // pred_check
          %p798 = pneg %p104
        $region38: #{tpu_custom_call.1} parent=31 // pred_check_branch
          %800 = sbr.rel (%p798) target = $region40
        $region39: #{tpu_custom_call.1} parent=31 // pred_region
          %s801 = smul.u32 2, %s18
          %s803 = ssub.s32 256, 256
          %804 = vsyncadd %s794, %s803
          %s805 = smul.addr %s801, 128
          %s806 = scalar_lea.hbm %s3, %s805
          %s807 = sshll.u32 %s797, 4
          %s808 = int_to_ptr.vmem [resolvable:$true] %s807
          %813 = dma.vmem_to_hbm [thread:$0]  %s808, 256, %s806, %s794, 128, 128, 8
        $region40: #{tpu_custom_call.1} parent=31 // pred_fallthru
          _
      $region32: #{tpu_custom_call.1} parent=5 // pred_fallthru
        _
      %p814 = scmp.le.s32.totalorder 2, %s13
      // Predicated region
      $region41: #{tpu_custom_call.1} parent=5 // pred_check
        %p815 = pneg %p814
      $region42: #{tpu_custom_call.1} parent=5 // pred_check_branch
        %817 = sbr.rel (%p815) target = $region44
      $region43: #{tpu_custom_call.1} parent=5 // pred_region
        %s818 = ssub.s32 %s13, 2
        // Predicated region
        $region45: #{tpu_custom_call.1} parent=43 // pred_check
          %p819 = pneg %p110
        $region46: #{tpu_custom_call.1} parent=43 // pred_check_branch
          %821 = sbr.rel (%p819) target = $region48
        $region47: #{tpu_custom_call.1} parent=43 // pred_region
          %s822 = sand.u32 %s95, 1
          %s823 = scalar_lea.sflag [#allocation4], %s822
          %s824 = sand.u32 %s95, 1
          %s825 = smul.addr %s824, 16
          %s826 = scalar_lea.vmem [#allocation5], %s825
          %827 = dma.done %s823, 256
        $region48: #{tpu_custom_call.1} parent=43 // pred_fallthru
          _
      $region44: #{tpu_custom_call.1} parent=5 // pred_fallthru
        _
    $region6: #{tpu_custom_call.1} parent=1 // loop_footer
      %s17 = sadd.s32 1, %s13
    $region7: #{tpu_custom_call.1} parent=1 // loop_footer_branch
      %12 = sbr.rel target = $region3
    $region8: #{tpu_custom_call.1} parent=1 // loop_exit
      _
    %828 = vsyncpa [#allocation3], 1
    %s829 = scalar_lea.sflag [#allocation3], 1
    %830 = vsyncpa %s829, 1
    %831 = vsyncpa [#allocation4], 1
    %s832 = scalar_lea.sflag [#allocation4], 1
    %833 = vsyncpa %s832, 1

</llo_original>
